<compile_context>
chip_gen: v7x
topology: tpu7x:2x2x1
jax: 0.10.0
libtpu: 0.0.40
codegen_flags: <defaults>
</compile_context>

<pallas_src>
import jax
import jax.numpy as jnp
import numpy as np
from jax.experimental import pallas as pl
from jax.experimental.pallas import tpu as pltpu


def _attn_gru_kernel(facts_ref,   # (1, S*Bc, Hin_p)  mxu dtype, chunk-major flat facts
                     g_ref,       # (S, Bc, 1)        f32 attention gates
                     wrw_ref,     # (Hin_p, 2*H_p)    mxu dtype, packed [Wr | W]
                     bfact_ref,   # (1, 2*H_p)        f32, packed [Wr_b + Ur_b | W_b]
                     uru_ref,     # (H_p, 2*H_p)      mxu dtype, packed [Ur | U]
                     brec_ref,    # (1, 2*H_p)        f32, packed [0 | U_b]
                     o_ref,       # (Bc, H_p)         f32 final hidden state C
                     pre_ref):    # VMEM scratch (S*Bc, 2*H_p) f32
    Bc, H_pad = o_ref.shape
    S = g_ref.shape[0]
    mxu_dtype = uru_ref.dtype

    # Hoisted off the serial chain: fact-side pre-activations for every step.
    #   pre[:, :H_pad] = Wr(fact) + Wr_b + Ur_b
    #   pre[:, H_pad:] = W(fact)  + W_b
    pre_ref[...] = (
        jnp.dot(facts_ref[0], wrw_ref[...], preferred_element_type=jnp.float32)
        + bfact_ref[...]
    )

    uru = uru_ref[...]
    # Hoisted broadcast: with unroll the loop would otherwise emit S broadcasts.
    brec = jnp.broadcast_to(brec_ref[...], (Bc, 2 * H_pad))

    def step(s, h):
        start = pl.multiple_of(s * Bc, Bc)
        pre = pre_ref[pl.ds(start, Bc), :]                        # (Bc, 2*H_pad)
        # Single MXU call on the serial critical path: h @ [Ur | U] (+ [0 | U_b]).
        rec = jnp.dot(h.astype(mxu_dtype), uru,
                      preferred_element_type=jnp.float32) + brec
        r = jax.nn.sigmoid(pre[:, :H_pad] + rec[:, :H_pad])
        h_tilda = jnp.tanh(pre[:, H_pad:] + r * rec[:, H_pad:])
        g = g_ref[s]                                              # (Bc, 1)
        return h + g * (h_tilda - h)        # == g*h_tilda + (1-g)*h, fewer VPU ops

    h0 = jnp.zeros((Bc, H_pad), jnp.float32)
    unroll = True if S <= 16 else 8         # bounded unroll for long sequences
    o_ref[...] = jax.lax.fori_loop(0, S, step, h0, unroll=unroll)


def _round_up(x, m):
    return ((x + m - 1) // m) * m


def attn_gru(facts, G, params, *, mxu_dtype=jnp.bfloat16):
    """facts: (B, S, Hin) float32, G: (B, S) float32 -> C: (B, H) float32."""
    B, S, Hin = facts.shape
    H = params["Wr_w"].shape[1]

    Hin_p = max(_round_up(Hin, 128), 128)   # lane-dense input dim
    H_p = max(_round_up(H, 128), 128)       # lane-dense hidden dim
    # Batch padded to a multiple of 16 (sublane / bf16-pack aligned).  Chunks of
    # <=128 rows form the (parallel) grid -> split across TCs on v7x.
    if B <= 128:
        B_p = max(_round_up(B, 16), 16)
        Bc = B_p
    else:
        B_p = _round_up(B, 128)
        Bc = 128
    nb = B_p // Bc

    # --- activations: chunk-major seq-flattened facts, f32 gates -------------
    facts_p = jnp.pad(facts.astype(jnp.float32),
                      ((0, B_p - B), (0, 0), (0, Hin_p - Hin)))      # (B_p, S, Hin_p)
    facts_cm = (facts_p.reshape(nb, Bc, S, Hin_p)
                .transpose(0, 2, 1, 3)
                .reshape(nb, S * Bc, Hin_p)
                .astype(mxu_dtype))                                  # (nb, S*Bc, Hin_p)
    g_sm = jnp.pad(G.astype(jnp.float32), ((0, B_p - B), (0, 0)))
    g_sm = jnp.transpose(g_sm, (1, 0))[:, :, None]                   # (S, B_p, 1)

    # --- packed, zero-padded weights / biases --------------------------------
    def pad_w(w, rows, cols):
        w = w.astype(jnp.float32)
        return jnp.pad(w, ((0, rows - w.shape[0]), (0, cols - w.shape[1])))

    def pad_b(b, cols):
        b = b.astype(jnp.float32).reshape(1, -1)
        return jnp.pad(b, ((0, 0), (0, cols - b.shape[1])))

    wrw = jnp.concatenate([pad_w(params["Wr_w"], Hin_p, H_p),
                           pad_w(params["W_w"], Hin_p, H_p)], axis=1
                          ).astype(mxu_dtype)                        # (Hin_p, 2H_p)
    uru = jnp.concatenate([pad_w(params["Ur_w"], H_p, H_p),
                           pad_w(params["U_w"], H_p, H_p)], axis=1
                          ).astype(mxu_dtype)                        # (H_p, 2H_p)
    b_fact = jnp.concatenate([pad_b(params["Wr_b"] + params["Ur_b"], H_p),
                              pad_b(params["W_b"], H_p)], axis=1)    # (1, 2H_p) f32
    b_rec = jnp.concatenate([jnp.zeros((1, H_p), jnp.float32),
                             pad_b(params["U_b"], H_p)], axis=1)     # (1, 2H_p) f32

    # --- VMEM budget from the actual per-core buffers -------------------------
    mxu_bytes = np.dtype(mxu_dtype).itemsize
    block_bytes = (S * Bc * Hin_p * mxu_bytes                 # facts block
                   + S * Bc * 4                               # gate block
                   + (Hin_p + H_p) * 2 * H_p * mxu_bytes      # packed weights
                   + 2 * 2 * H_p * 4                          # packed biases
                   + Bc * H_p * 4)                            # output block
    scratch_bytes = S * Bc * 2 * H_p * 4
    vmem_bytes = 2 * block_bytes + scratch_bytes + (4 << 20)  # double-buffer + headroom
    vmem_bytes = max(vmem_bytes, 32 << 20)
    try:
        cap = int(pltpu.get_tpu_info().vmem_capacity_bytes) - (8 << 20)
    except Exception:
        cap = 96 << 20
    vmem_bytes = min(vmem_bytes, cap)

    cost = pl.CostEstimate(
        flops=2 * S * B_p * (Hin_p + H_p) * 2 * H_p,
        transcendentals=2 * S * B_p * H_p,
        bytes_accessed=int(facts_cm.size * mxu_bytes + g_sm.size * 4
                           + (wrw.size + uru.size) * mxu_bytes
                           + (b_fact.size + b_rec.size) * 4 + B_p * H_p * 4),
    )

    out = pl.pallas_call(
        _attn_gru_kernel,
        out_shape=jax.ShapeDtypeStruct((B_p, H_p), jnp.float32),
        grid_spec=pltpu.PrefetchScalarGridSpec(
            num_scalar_prefetch=0,
            grid=(nb,),
            in_specs=[
                pl.BlockSpec((1, S * Bc, Hin_p), lambda b: (b, 0, 0)),
                pl.BlockSpec((S, Bc, 1), lambda b: (0, b, 0)),
                pl.BlockSpec((Hin_p, 2 * H_p), lambda b: (0, 0)),
                pl.BlockSpec((1, 2 * H_p), lambda b: (0, 0)),
                pl.BlockSpec((H_p, 2 * H_p), lambda b: (0, 0)),
                pl.BlockSpec((1, 2 * H_p), lambda b: (0, 0)),
            ],
            out_specs=pl.BlockSpec((Bc, H_p), lambda b: (b, 0)),
            scratch_shapes=[pltpu.VMEM((S * Bc, 2 * H_p), jnp.float32)],
        ),
        compiler_params=pltpu.CompilerParams(
            dimension_semantics=("parallel",),
            vmem_limit_bytes=int(vmem_bytes),
        ),
        cost_estimate=cost,
    )(facts_cm, g_sm, wrw, b_fact, uru, b_rec)

    return out[:B, :H]


def attn_gru_reference(facts, G, params):
    """Pure-JAX reference mirroring the PyTorch loop (unpadded, unpacked, f32)."""
    B, S, _ = facts.shape
    H = params["Wr_w"].shape[1]
    h = jnp.zeros((B, H), jnp.float32)
    for s in range(S):
        fact = facts[:, s, :]
        g = G[:, s][:, None]
        r = jax.nn.sigmoid(fact @ params["Wr_w"] + params["Wr_b"]
                           + h @ params["Ur_w"] + params["Ur_b"])
        h_tilda = jnp.tanh(fact @ params["W_w"] + params["W_b"]
                           + r * (h @ params["U_w"] + params["U_b"]))
        h = g * h_tilda + (1.0 - g) * h
    return h


def make_params(key, input_size, hidden_size):
    """Deterministic params. Weights ~ xavier_normal, stored as (in, out)."""
    ks = jax.random.split(key, 8)

    def xavier(k, fan_in, fan_out):
        std = np.sqrt(2.0 / (fan_in + fan_out))
        # PyTorch Linear weight is (out, in); we store the transpose (in, out).
        return (jax.random.normal(k, (fan_out, fan_in), jnp.float32) * std).T

    def bias(k, fan_in, n):
        bound = 1.0 / np.sqrt(fan_in)
        return jax.random.uniform(k, (1, n), jnp.float32, -bound, bound)

    return {
        "Wr_w": xavier(ks[0], input_size, hidden_size), "Wr_b": bias(ks[1], input_size, hidden_size),
        "Ur_w": xavier(ks[2], hidden_size, hidden_size), "Ur_b": bias(ks[3], hidden_size, hidden_size),
        "W_w": xavier(ks[4], input_size, hidden_size), "W_b": bias(ks[5], input_size, hidden_size),
        "U_w": xavier(ks[6], hidden_size, hidden_size), "U_b": bias(ks[7], hidden_size, hidden_size),
    }


if __name__ == "__main__":
    B, S, H = 8, 8, 32          # input_size == hidden_size (required by the module)
    key = jax.random.PRNGKey(0)
    k_facts, k_g, k_params = jax.random.split(key, 3)

    facts = jax.random.normal(k_facts, (B, S, H), jnp.float32)
    G = jax.nn.softmax(jax.random.normal(k_g, (B, S), jnp.float32), axis=-1)
    params = make_params(k_params, H, H)

    ref = attn_gru_reference(facts, G, params)

    # Exact-math check (f32 MXU inputs): tight tolerance.
    out_f32 = jax.block_until_ready(attn_gru(facts, G, params, mxu_dtype=jnp.float32))
    np.testing.assert_allclose(np.asarray(out_f32), np.asarray(ref), rtol=1e-5, atol=1e-5)

    # Default fast path (bf16 MXU inputs, f32 accumulate / carried state).
    out = jax.block_until_ready(attn_gru(facts, G, params))
    np.testing.assert_allclose(np.asarray(out), np.asarray(ref), rtol=3e-2, atol=3e-2)

    print("KERNEL_OK")
</pallas_src>

<mosaic_0001>
module attributes {stable_mosaic.version = 11 : i64} {
  func.func @_attn_gru_kernel(%arg0: i32, %arg1: memref<1x128x128xf32, #tpu.memory_space<vmem>>, %arg2: memref<8x16x1xf32, #tpu.memory_space<vmem>>, %arg3: memref<128x256xf32, #tpu.memory_space<vmem>>, %arg4: memref<1x256xf32, #tpu.memory_space<vmem>>, %arg5: memref<128x256xf32, #tpu.memory_space<vmem>>, %arg6: memref<1x256xf32, #tpu.memory_space<vmem>>, %arg7: memref<16x128xf32, #tpu.memory_space<vmem>>, %arg8: memref<128x256xf32, #tpu.memory_space<vmem>>) attributes {dimension_semantics = [#tpu.dimension_semantics<parallel>], iteration_bounds = array<i64: 1>, scalar_prefetch = 0 : i64, scratch_operands = 1 : i64, tpu.core_type = #tpu.core_type<tc>, window_params = [{transform_indices = @transform_0, window_bounds = array<i64: 1, 128, 128>}, {transform_indices = @transform_1, window_bounds = array<i64: 8, 16, 1>}, {pipeline_mode = #tpu.pipeline_mode<synchronous>, transform_indices = @transform_2, window_bounds = array<i64: 128, 256>}, {pipeline_mode = #tpu.pipeline_mode<synchronous>, transform_indices = @transform_3, window_bounds = array<i64: 1, 256>}, {pipeline_mode = #tpu.pipeline_mode<synchronous>, transform_indices = @transform_4, window_bounds = array<i64: 128, 256>}, {pipeline_mode = #tpu.pipeline_mode<synchronous>, transform_indices = @transform_5, window_bounds = array<i64: 1, 256>}, {transform_indices = @transform_6, window_bounds = array<i64: 16, 128>}]} {
    %c0 = arith.constant 0 : index
    %c0_0 = arith.constant 0 : index
    %c0_1 = arith.constant 0 : index
    %0 = vector.load %arg1[%c0, %c0_0, %c0_1] : memref<1x128x128xf32, #tpu.memory_space<vmem>>, vector<1x128x128xf32>
    %1 = vector.shape_cast %0 : vector<1x128x128xf32> to vector<128x128xf32>
    %c0_2 = arith.constant 0 : index
    %c0_3 = arith.constant 0 : index
    %2 = vector.load %arg3[%c0_2, %c0_3] : memref<128x256xf32, #tpu.memory_space<vmem>>, vector<128x256xf32>
    %cst = arith.constant dense<0.000000e+00> : vector<128x256xf32>
    %3 = tpu.matmul %1, %2, %cst {dimension_numbers = #tpu.dot_dimension_numbers<[1], [0], [0], [1], [0, 0, 1, 1], [], []>} : vector<128x128xf32>, vector<128x256xf32>, vector<128x256xf32> -> vector<128x256xf32>
    %c0_4 = arith.constant 0 : index
    %c0_5 = arith.constant 0 : index
    %4 = vector.load %arg4[%c0_4, %c0_5] : memref<1x256xf32, #tpu.memory_space<vmem>>, vector<1x256xf32>
    %5 = vector.broadcast %4 : vector<1x256xf32> to vector<128x256xf32>
    %6 = arith.addf %3, %5 : vector<128x256xf32>
    %c0_6 = arith.constant 0 : index
    %c0_7 = arith.constant 0 : index
    %7 = vector.load %arg8[%c0_6, %c0_7] : memref<128x256xf32, #tpu.memory_space<vmem>>, vector<128x256xf32>
    tpu.vector_store %arg8[%c0_6, %c0_7], %6 {strides = array<i32>} : memref<128x256xf32, #tpu.memory_space<vmem>>, vector<128x256xf32>,
    %c0_8 = arith.constant 0 : index
    %c0_9 = arith.constant 0 : index
    %8 = vector.load %arg5[%c0_8, %c0_9] : memref<128x256xf32, #tpu.memory_space<vmem>>, vector<128x256xf32>
    %c0_10 = arith.constant 0 : index
    %c0_11 = arith.constant 0 : index
    %9 = vector.load %arg6[%c0_10, %c0_11] : memref<1x256xf32, #tpu.memory_space<vmem>>, vector<1x256xf32>
    %10 = vector.shape_cast %9 : vector<1x256xf32> to vector<1x256xf32>
    %11 = vector.broadcast %10 : vector<1x256xf32> to vector<16x256xf32>
    %cst_12 = arith.constant 0.000000e+00 : f32
    %12 = vector.broadcast %cst_12 : f32 to vector<16x128xf32>
    %c0_i32 = arith.constant 0 : i32
    %c16_i32 = arith.constant 16 : i32
    %13 = arith.muli %c0_i32, %c16_i32 : i32
    %14 = tpu.assume_multiple %13, 16 : i32
    %15 = arith.index_cast %14 : i32 to index
    %c0_13 = arith.constant 0 : index
    %16 = vector.load %arg8[%15, %c0_13] : memref<128x256xf32, #tpu.memory_space<vmem>>, vector<16x256xf32>
    %cst_14 = arith.constant dense<0.000000e+00> : vector<16x256xf32>
    %17 = tpu.matmul %12, %8, %cst_14 {dimension_numbers = #tpu.dot_dimension_numbers<[1], [0], [0], [1], [0, 0, 1, 1], [], []>} : vector<16x128xf32>, vector<128x256xf32>, vector<16x256xf32> -> vector<16x256xf32>
    %18 = arith.addf %17, %11 : vector<16x256xf32>
    %19 = vector.extract_strided_slice %16 {offsets = [0, 0], sizes = [16, 128], strides = [1, 1]} : vector<16x256xf32> to vector<16x128xf32>
    %20 = vector.extract_strided_slice %18 {offsets = [0, 0], sizes = [16, 128], strides = [1, 1]} : vector<16x256xf32> to vector<16x128xf32>
    %21 = arith.addf %19, %20 : vector<16x128xf32>
    %22 = arith.negf %21 : vector<16x128xf32>
    %23 = math.exp %22 : vector<16x128xf32>
    %cst_15 = arith.constant 1.000000e+00 : f32
    %24 = vector.broadcast %cst_15 : f32 to vector<16x128xf32>
    %25 = arith.addf %24, %23 : vector<16x128xf32>
    %26 = arith.divf %24, %25 : vector<16x128xf32>
    %27 = vector.extract_strided_slice %16 {offsets = [0, 128], sizes = [16, 128], strides = [1, 1]} : vector<16x256xf32> to vector<16x128xf32>
    %28 = vector.extract_strided_slice %18 {offsets = [0, 128], sizes = [16, 128], strides = [1, 1]} : vector<16x256xf32> to vector<16x128xf32>
    %29 = arith.mulf %26, %28 : vector<16x128xf32>
    %30 = arith.addf %27, %29 : vector<16x128xf32>
    %31 = math.tanh %30 : vector<16x128xf32>
    %32 = arith.index_cast %c0_i32 : i32 to index
    %c0_16 = arith.constant 0 : index
    %c0_17 = arith.constant 0 : index
    %33 = vector.load %arg2[%32, %c0_16, %c0_17] : memref<8x16x1xf32, #tpu.memory_space<vmem>>, vector<1x16x1xf32>
    %34 = vector.shape_cast %33 : vector<1x16x1xf32> to vector<16x1xf32>
    %35 = arith.subf %31, %12 : vector<16x128xf32>
    %36 = vector.broadcast %34 : vector<16x1xf32> to vector<16x128xf32>
    %37 = arith.mulf %36, %35 : vector<16x128xf32>
    %38 = arith.addf %12, %37 : vector<16x128xf32>
    %c1_i32 = arith.constant 1 : i32
    %c16_i32_18 = arith.constant 16 : i32
    %39 = arith.muli %c1_i32, %c16_i32_18 : i32
    %40 = tpu.assume_multiple %39, 16 : i32
    %41 = arith.index_cast %40 : i32 to index
    %c0_19 = arith.constant 0 : index
    %42 = vector.load %arg8[%41, %c0_19] : memref<128x256xf32, #tpu.memory_space<vmem>>, vector<16x256xf32>
    %cst_20 = arith.constant dense<0.000000e+00> : vector<16x256xf32>
    %43 = tpu.matmul %38, %8, %cst_20 {dimension_numbers = #tpu.dot_dimension_numbers<[1], [0], [0], [1], [0, 0, 1, 1], [], []>} : vector<16x128xf32>, vector<128x256xf32>, vector<16x256xf32> -> vector<16x256xf32>
    %44 = arith.addf %43, %11 : vector<16x256xf32>
    %45 = vector.extract_strided_slice %42 {offsets = [0, 0], sizes = [16, 128], strides = [1, 1]} : vector<16x256xf32> to vector<16x128xf32>
    %46 = vector.extract_strided_slice %44 {offsets = [0, 0], sizes = [16, 128], strides = [1, 1]} : vector<16x256xf32> to vector<16x128xf32>
    %47 = arith.addf %45, %46 : vector<16x128xf32>
    %48 = arith.negf %47 : vector<16x128xf32>
    %49 = math.exp %48 : vector<16x128xf32>
    %cst_21 = arith.constant 1.000000e+00 : f32
    %50 = vector.broadcast %cst_21 : f32 to vector<16x128xf32>
    %51 = arith.addf %50, %49 : vector<16x128xf32>
    %52 = arith.divf %50, %51 : vector<16x128xf32>
    %53 = vector.extract_strided_slice %42 {offsets = [0, 128], sizes = [16, 128], strides = [1, 1]} : vector<16x256xf32> to vector<16x128xf32>
    %54 = vector.extract_strided_slice %44 {offsets = [0, 128], sizes = [16, 128], strides = [1, 1]} : vector<16x256xf32> to vector<16x128xf32>
    %55 = arith.mulf %52, %54 : vector<16x128xf32>
    %56 = arith.addf %53, %55 : vector<16x128xf32>
    %57 = math.tanh %56 : vector<16x128xf32>
    %58 = arith.index_cast %c1_i32 : i32 to index
    %c0_22 = arith.constant 0 : index
    %c0_23 = arith.constant 0 : index
    %59 = vector.load %arg2[%58, %c0_22, %c0_23] : memref<8x16x1xf32, #tpu.memory_space<vmem>>, vector<1x16x1xf32>
    %60 = vector.shape_cast %59 : vector<1x16x1xf32> to vector<16x1xf32>
    %61 = arith.subf %57, %38 : vector<16x128xf32>
    %62 = vector.broadcast %60 : vector<16x1xf32> to vector<16x128xf32>
    %63 = arith.mulf %62, %61 : vector<16x128xf32>
    %64 = arith.addf %38, %63 : vector<16x128xf32>
    %c2_i32 = arith.constant 2 : i32
    %c16_i32_24 = arith.constant 16 : i32
    %65 = arith.muli %c2_i32, %c16_i32_24 : i32
    %66 = tpu.assume_multiple %65, 16 : i32
    %67 = arith.index_cast %66 : i32 to index
    %c0_25 = arith.constant 0 : index
    %68 = vector.load %arg8[%67, %c0_25] : memref<128x256xf32, #tpu.memory_space<vmem>>, vector<16x256xf32>
    %cst_26 = arith.constant dense<0.000000e+00> : vector<16x256xf32>
    %69 = tpu.matmul %64, %8, %cst_26 {dimension_numbers = #tpu.dot_dimension_numbers<[1], [0], [0], [1], [0, 0, 1, 1], [], []>} : vector<16x128xf32>, vector<128x256xf32>, vector<16x256xf32> -> vector<16x256xf32>
    %70 = arith.addf %69, %11 : vector<16x256xf32>
    %71 = vector.extract_strided_slice %68 {offsets = [0, 0], sizes = [16, 128], strides = [1, 1]} : vector<16x256xf32> to vector<16x128xf32>
    %72 = vector.extract_strided_slice %70 {offsets = [0, 0], sizes = [16, 128], strides = [1, 1]} : vector<16x256xf32> to vector<16x128xf32>
    %73 = arith.addf %71, %72 : vector<16x128xf32>
    %74 = arith.negf %73 : vector<16x128xf32>
    %75 = math.exp %74 : vector<16x128xf32>
    %cst_27 = arith.constant 1.000000e+00 : f32
    %76 = vector.broadcast %cst_27 : f32 to vector<16x128xf32>
    %77 = arith.addf %76, %75 : vector<16x128xf32>
    %78 = arith.divf %76, %77 : vector<16x128xf32>
    %79 = vector.extract_strided_slice %68 {offsets = [0, 128], sizes = [16, 128], strides = [1, 1]} : vector<16x256xf32> to vector<16x128xf32>
    %80 = vector.extract_strided_slice %70 {offsets = [0, 128], sizes = [16, 128], strides = [1, 1]} : vector<16x256xf32> to vector<16x128xf32>
    %81 = arith.mulf %78, %80 : vector<16x128xf32>
    %82 = arith.addf %79, %81 : vector<16x128xf32>
    %83 = math.tanh %82 : vector<16x128xf32>
    %84 = arith.index_cast %c2_i32 : i32 to index
    %c0_28 = arith.constant 0 : index
    %c0_29 = arith.constant 0 : index
    %85 = vector.load %arg2[%84, %c0_28, %c0_29] : memref<8x16x1xf32, #tpu.memory_space<vmem>>, vector<1x16x1xf32>
    %86 = vector.shape_cast %85 : vector<1x16x1xf32> to vector<16x1xf32>
    %87 = arith.subf %83, %64 : vector<16x128xf32>
    %88 = vector.broadcast %86 : vector<16x1xf32> to vector<16x128xf32>
    %89 = arith.mulf %88, %87 : vector<16x128xf32>
    %90 = arith.addf %64, %89 : vector<16x128xf32>
    %c3_i32 = arith.constant 3 : i32
    %c16_i32_30 = arith.constant 16 : i32
    %91 = arith.muli %c3_i32, %c16_i32_30 : i32
    %92 = tpu.assume_multiple %91, 16 : i32
    %93 = arith.index_cast %92 : i32 to index
    %c0_31 = arith.constant 0 : index
    %94 = vector.load %arg8[%93, %c0_31] : memref<128x256xf32, #tpu.memory_space<vmem>>, vector<16x256xf32>
    %cst_32 = arith.constant dense<0.000000e+00> : vector<16x256xf32>
    %95 = tpu.matmul %90, %8, %cst_32 {dimension_numbers = #tpu.dot_dimension_numbers<[1], [0], [0], [1], [0, 0, 1, 1], [], []>} : vector<16x128xf32>, vector<128x256xf32>, vector<16x256xf32> -> vector<16x256xf32>
    %96 = arith.addf %95, %11 : vector<16x256xf32>
    %97 = vector.extract_strided_slice %94 {offsets = [0, 0], sizes = [16, 128], strides = [1, 1]} : vector<16x256xf32> to vector<16x128xf32>
    %98 = vector.extract_strided_slice %96 {offsets = [0, 0], sizes = [16, 128], strides = [1, 1]} : vector<16x256xf32> to vector<16x128xf32>
    %99 = arith.addf %97, %98 : vector<16x128xf32>
    %100 = arith.negf %99 : vector<16x128xf32>
    %101 = math.exp %100 : vector<16x128xf32>
    %cst_33 = arith.constant 1.000000e+00 : f32
    %102 = vector.broadcast %cst_33 : f32 to vector<16x128xf32>
    %103 = arith.addf %102, %101 : vector<16x128xf32>
    %104 = arith.divf %102, %103 : vector<16x128xf32>
    %105 = vector.extract_strided_slice %94 {offsets = [0, 128], sizes = [16, 128], strides = [1, 1]} : vector<16x256xf32> to vector<16x128xf32>
    %106 = vector.extract_strided_slice %96 {offsets = [0, 128], sizes = [16, 128], strides = [1, 1]} : vector<16x256xf32> to vector<16x128xf32>
    %107 = arith.mulf %104, %106 : vector<16x128xf32>
    %108 = arith.addf %105, %107 : vector<16x128xf32>
    %109 = math.tanh %108 : vector<16x128xf32>
    %110 = arith.index_cast %c3_i32 : i32 to index
    %c0_34 = arith.constant 0 : index
    %c0_35 = arith.constant 0 : index
    %111 = vector.load %arg2[%110, %c0_34, %c0_35] : memref<8x16x1xf32, #tpu.memory_space<vmem>>, vector<1x16x1xf32>
    %112 = vector.shape_cast %111 : vector<1x16x1xf32> to vector<16x1xf32>
    %113 = arith.subf %109, %90 : vector<16x128xf32>
    %114 = vector.broadcast %112 : vector<16x1xf32> to vector<16x128xf32>
    %115 = arith.mulf %114, %113 : vector<16x128xf32>
    %116 = arith.addf %90, %115 : vector<16x128xf32>
    %c4_i32 = arith.constant 4 : i32
    %c16_i32_36 = arith.constant 16 : i32
    %117 = arith.muli %c4_i32, %c16_i32_36 : i32
    %118 = tpu.assume_multiple %117, 16 : i32
    %119 = arith.index_cast %118 : i32 to index
    %c0_37 = arith.constant 0 : index
    %120 = vector.load %arg8[%119, %c0_37] : memref<128x256xf32, #tpu.memory_space<vmem>>, vector<16x256xf32>
    %cst_38 = arith.constant dense<0.000000e+00> : vector<16x256xf32>
    %121 = tpu.matmul %116, %8, %cst_38 {dimension_numbers = #tpu.dot_dimension_numbers<[1], [0], [0], [1], [0, 0, 1, 1], [], []>} : vector<16x128xf32>, vector<128x256xf32>, vector<16x256xf32> -> vector<16x256xf32>
    %122 = arith.addf %121, %11 : vector<16x256xf32>
    %123 = vector.extract_strided_slice %120 {offsets = [0, 0], sizes = [16, 128], strides = [1, 1]} : vector<16x256xf32> to vector<16x128xf32>
    %124 = vector.extract_strided_slice %122 {offsets = [0, 0], sizes = [16, 128], strides = [1, 1]} : vector<16x256xf32> to vector<16x128xf32>
    %125 = arith.addf %123, %124 : vector<16x128xf32>
    %126 = arith.negf %125 : vector<16x128xf32>
    %127 = math.exp %126 : vector<16x128xf32>
    %cst_39 = arith.constant 1.000000e+00 : f32
    %128 = vector.broadcast %cst_39 : f32 to vector<16x128xf32>
    %129 = arith.addf %128, %127 : vector<16x128xf32>
    %130 = arith.divf %128, %129 : vector<16x128xf32>
    %131 = vector.extract_strided_slice %120 {offsets = [0, 128], sizes = [16, 128], strides = [1, 1]} : vector<16x256xf32> to vector<16x128xf32>
    %132 = vector.extract_strided_slice %122 {offsets = [0, 128], sizes = [16, 128], strides = [1, 1]} : vector<16x256xf32> to vector<16x128xf32>
    %133 = arith.mulf %130, %132 : vector<16x128xf32>
    %134 = arith.addf %131, %133 : vector<16x128xf32>
    %135 = math.tanh %134 : vector<16x128xf32>
    %136 = arith.index_cast %c4_i32 : i32 to index
    %c0_40 = arith.constant 0 : index
    %c0_41 = arith.constant 0 : index
    %137 = vector.load %arg2[%136, %c0_40, %c0_41] : memref<8x16x1xf32, #tpu.memory_space<vmem>>, vector<1x16x1xf32>
    %138 = vector.shape_cast %137 : vector<1x16x1xf32> to vector<16x1xf32>
    %139 = arith.subf %135, %116 : vector<16x128xf32>
    %140 = vector.broadcast %138 : vector<16x1xf32> to vector<16x128xf32>
    %141 = arith.mulf %140, %139 : vector<16x128xf32>
    %142 = arith.addf %116, %141 : vector<16x128xf32>
    %c5_i32 = arith.constant 5 : i32
    %c16_i32_42 = arith.constant 16 : i32
    %143 = arith.muli %c5_i32, %c16_i32_42 : i32
    %144 = tpu.assume_multiple %143, 16 : i32
    %145 = arith.index_cast %144 : i32 to index
    %c0_43 = arith.constant 0 : index
    %146 = vector.load %arg8[%145, %c0_43] : memref<128x256xf32, #tpu.memory_space<vmem>>, vector<16x256xf32>
    %cst_44 = arith.constant dense<0.000000e+00> : vector<16x256xf32>
    %147 = tpu.matmul %142, %8, %cst_44 {dimension_numbers = #tpu.dot_dimension_numbers<[1], [0], [0], [1], [0, 0, 1, 1], [], []>} : vector<16x128xf32>, vector<128x256xf32>, vector<16x256xf32> -> vector<16x256xf32>
    %148 = arith.addf %147, %11 : vector<16x256xf32>
    %149 = vector.extract_strided_slice %146 {offsets = [0, 0], sizes = [16, 128], strides = [1, 1]} : vector<16x256xf32> to vector<16x128xf32>
    %150 = vector.extract_strided_slice %148 {offsets = [0, 0], sizes = [16, 128], strides = [1, 1]} : vector<16x256xf32> to vector<16x128xf32>
    %151 = arith.addf %149, %150 : vector<16x128xf32>
    %152 = arith.negf %151 : vector<16x128xf32>
    %153 = math.exp %152 : vector<16x128xf32>
    %cst_45 = arith.constant 1.000000e+00 : f32
    %154 = vector.broadcast %cst_45 : f32 to vector<16x128xf32>
    %155 = arith.addf %154, %153 : vector<16x128xf32>
    %156 = arith.divf %154, %155 : vector<16x128xf32>
    %157 = vector.extract_strided_slice %146 {offsets = [0, 128], sizes = [16, 128], strides = [1, 1]} : vector<16x256xf32> to vector<16x128xf32>
    %158 = vector.extract_strided_slice %148 {offsets = [0, 128], sizes = [16, 128], strides = [1, 1]} : vector<16x256xf32> to vector<16x128xf32>
    %159 = arith.mulf %156, %158 : vector<16x128xf32>
    %160 = arith.addf %157, %159 : vector<16x128xf32>
    %161 = math.tanh %160 : vector<16x128xf32>
    %162 = arith.index_cast %c5_i32 : i32 to index
    %c0_46 = arith.constant 0 : index
    %c0_47 = arith.constant 0 : index
    %163 = vector.load %arg2[%162, %c0_46, %c0_47] : memref<8x16x1xf32, #tpu.memory_space<vmem>>, vector<1x16x1xf32>
    %164 = vector.shape_cast %163 : vector<1x16x1xf32> to vector<16x1xf32>
    %165 = arith.subf %161, %142 : vector<16x128xf32>
    %166 = vector.broadcast %164 : vector<16x1xf32> to vector<16x128xf32>
    %167 = arith.mulf %166, %165 : vector<16x128xf32>
    %168 = arith.addf %142, %167 : vector<16x128xf32>
    %c6_i32 = arith.constant 6 : i32
    %c16_i32_48 = arith.constant 16 : i32
    %169 = arith.muli %c6_i32, %c16_i32_48 : i32
    %170 = tpu.assume_multiple %169, 16 : i32
    %171 = arith.index_cast %170 : i32 to index
    %c0_49 = arith.constant 0 : index
    %172 = vector.load %arg8[%171, %c0_49] : memref<128x256xf32, #tpu.memory_space<vmem>>, vector<16x256xf32>
    %cst_50 = arith.constant dense<0.000000e+00> : vector<16x256xf32>
    %173 = tpu.matmul %168, %8, %cst_50 {dimension_numbers = #tpu.dot_dimension_numbers<[1], [0], [0], [1], [0, 0, 1, 1], [], []>} : vector<16x128xf32>, vector<128x256xf32>, vector<16x256xf32> -> vector<16x256xf32>
    %174 = arith.addf %173, %11 : vector<16x256xf32>
    %175 = vector.extract_strided_slice %172 {offsets = [0, 0], sizes = [16, 128], strides = [1, 1]} : vector<16x256xf32> to vector<16x128xf32>
    %176 = vector.extract_strided_slice %174 {offsets = [0, 0], sizes = [16, 128], strides = [1, 1]} : vector<16x256xf32> to vector<16x128xf32>
    %177 = arith.addf %175, %176 : vector<16x128xf32>
    %178 = arith.negf %177 : vector<16x128xf32>
    %179 = math.exp %178 : vector<16x128xf32>
    %cst_51 = arith.constant 1.000000e+00 : f32
    %180 = vector.broadcast %cst_51 : f32 to vector<16x128xf32>
    %181 = arith.addf %180, %179 : vector<16x128xf32>
    %182 = arith.divf %180, %181 : vector<16x128xf32>
    %183 = vector.extract_strided_slice %172 {offsets = [0, 128], sizes = [16, 128], strides = [1, 1]} : vector<16x256xf32> to vector<16x128xf32>
    %184 = vector.extract_strided_slice %174 {offsets = [0, 128], sizes = [16, 128], strides = [1, 1]} : vector<16x256xf32> to vector<16x128xf32>
    %185 = arith.mulf %182, %184 : vector<16x128xf32>
    %186 = arith.addf %183, %185 : vector<16x128xf32>
    %187 = math.tanh %186 : vector<16x128xf32>
    %188 = arith.index_cast %c6_i32 : i32 to index
    %c0_52 = arith.constant 0 : index
    %c0_53 = arith.constant 0 : index
    %189 = vector.load %arg2[%188, %c0_52, %c0_53] : memref<8x16x1xf32, #tpu.memory_space<vmem>>, vector<1x16x1xf32>
    %190 = vector.shape_cast %189 : vector<1x16x1xf32> to vector<16x1xf32>
    %191 = arith.subf %187, %168 : vector<16x128xf32>
    %192 = vector.broadcast %190 : vector<16x1xf32> to vector<16x128xf32>
    %193 = arith.mulf %192, %191 : vector<16x128xf32>
    %194 = arith.addf %168, %193 : vector<16x128xf32>
    %c7_i32 = arith.constant 7 : i32
    %c16_i32_54 = arith.constant 16 : i32
    %195 = arith.muli %c7_i32, %c16_i32_54 : i32
    %196 = tpu.assume_multiple %195, 16 : i32
    %197 = arith.index_cast %196 : i32 to index
    %c0_55 = arith.constant 0 : index
    %198 = vector.load %arg8[%197, %c0_55] : memref<128x256xf32, #tpu.memory_space<vmem>>, vector<16x256xf32>
    %cst_56 = arith.constant dense<0.000000e+00> : vector<16x256xf32>
    %199 = tpu.matmul %194, %8, %cst_56 {dimension_numbers = #tpu.dot_dimension_numbers<[1], [0], [0], [1], [0, 0, 1, 1], [], []>} : vector<16x128xf32>, vector<128x256xf32>, vector<16x256xf32> -> vector<16x256xf32>
    %200 = arith.addf %199, %11 : vector<16x256xf32>
    %201 = vector.extract_strided_slice %198 {offsets = [0, 0], sizes = [16, 128], strides = [1, 1]} : vector<16x256xf32> to vector<16x128xf32>
    %202 = vector.extract_strided_slice %200 {offsets = [0, 0], sizes = [16, 128], strides = [1, 1]} : vector<16x256xf32> to vector<16x128xf32>
    %203 = arith.addf %201, %202 : vector<16x128xf32>
    %204 = arith.negf %203 : vector<16x128xf32>
    %205 = math.exp %204 : vector<16x128xf32>
    %cst_57 = arith.constant 1.000000e+00 : f32
    %206 = vector.broadcast %cst_57 : f32 to vector<16x128xf32>
    %207 = arith.addf %206, %205 : vector<16x128xf32>
    %208 = arith.divf %206, %207 : vector<16x128xf32>
    %209 = vector.extract_strided_slice %198 {offsets = [0, 128], sizes = [16, 128], strides = [1, 1]} : vector<16x256xf32> to vector<16x128xf32>
    %210 = vector.extract_strided_slice %200 {offsets = [0, 128], sizes = [16, 128], strides = [1, 1]} : vector<16x256xf32> to vector<16x128xf32>
    %211 = arith.mulf %208, %210 : vector<16x128xf32>
    %212 = arith.addf %209, %211 : vector<16x128xf32>
    %213 = math.tanh %212 : vector<16x128xf32>
    %214 = arith.index_cast %c7_i32 : i32 to index
    %c0_58 = arith.constant 0 : index
    %c0_59 = arith.constant 0 : index
    %215 = vector.load %arg2[%214, %c0_58, %c0_59] : memref<8x16x1xf32, #tpu.memory_space<vmem>>, vector<1x16x1xf32>
    %216 = vector.shape_cast %215 : vector<1x16x1xf32> to vector<16x1xf32>
    %217 = arith.subf %213, %194 : vector<16x128xf32>
    %218 = vector.broadcast %216 : vector<16x1xf32> to vector<16x128xf32>
    %219 = arith.mulf %218, %217 : vector<16x128xf32>
    %220 = arith.addf %194, %219 : vector<16x128xf32>
    %c8_i32 = arith.constant 8 : i32
    %c0_60 = arith.constant 0 : index
    %c0_61 = arith.constant 0 : index
    %221 = vector.load %arg7[%c0_60, %c0_61] : memref<16x128xf32, #tpu.memory_space<vmem>>, vector<16x128xf32>
    tpu.vector_store %arg7[%c0_60, %c0_61], %220 {strides = array<i32>} : memref<16x128xf32, #tpu.memory_space<vmem>>, vector<16x128xf32>,
    return
  }
  func.func @transform_0(%arg0: i32) -> (i32, i32, i32) {
    %c0_i32 = arith.constant 0 : i32
    %c0_i32_0 = arith.constant 0 : i32
    %c0_i32_1 = arith.constant 0 : i32
    return %arg0, %c0_i32, %c0_i32_0 : i32, i32, i32
  }
  func.func @transform_1(%arg0: i32) -> (i32, i32, i32) {
    %c0_i32 = arith.constant 0 : i32
    %c0_i32_0 = arith.constant 0 : i32
    %c0_i32_1 = arith.constant 0 : i32
    return %c0_i32, %arg0, %c0_i32_0 : i32, i32, i32
  }
  func.func @transform_2(%arg0: i32) -> (i32, i32) {
    %c0_i32 = arith.constant 0 : i32
    %c0_i32_0 = arith.constant 0 : i32
    %c0_i32_1 = arith.constant 0 : i32
    return %c0_i32, %c0_i32_0 : i32, i32
  }
  func.func @transform_3(%arg0: i32) -> (i32, i32) {
    %c0_i32 = arith.constant 0 : i32
    %c0_i32_0 = arith.constant 0 : i32
    %c0_i32_1 = arith.constant 0 : i32
    return %c0_i32, %c0_i32_0 : i32, i32
  }
  func.func @transform_4(%arg0: i32) -> (i32, i32) {
    %c0_i32 = arith.constant 0 : i32
    %c0_i32_0 = arith.constant 0 : i32
    %c0_i32_1 = arith.constant 0 : i32
    return %c0_i32, %c0_i32_0 : i32, i32
  }
  func.func @transform_5(%arg0: i32) -> (i32, i32) {
    %c0_i32 = arith.constant 0 : i32
    %c0_i32_0 = arith.constant 0 : i32
    %c0_i32_1 = arith.constant 0 : i32
    return %c0_i32, %c0_i32_0 : i32, i32
  }
  func.func @transform_6(%arg0: i32) -> (i32, i32) {
    %c0_i32 = arith.constant 0 : i32
    %c0_i32_0 = arith.constant 0 : i32
    return %arg0, %c0_i32 : i32, i32
  }
}

</mosaic_0001>

<llo_original>
// kernel: tpu_custom_call.1
$region0: #{tpu_custom_call.1}
  #allocation0 [shape = 'u32[]', space=smem, size = 0x4, offset = 0x4, fixed_abs, tag = 'smem constant byte address 0x4 - core index']
  #allocation1 [shape = 'u32[144,128]{1,0:T(1,128)}', space=vmem, size = 0x12000, scoped, tag = 'internal scratch']
  #allocation2 [shape = 'f32[128,256]{1,0:T(8,128)}', space=vmem, size = 0x20000, scoped, tag = 'scratch operand']
  %s0 = inlined_call_operand.vmem [shape: f32[1,128,128], index: 0, kind: input, shape index: {}]
  %s1 = inlined_call_operand.vmem [shape: f32[8,16,1], index: 1, kind: input, shape index: {}]
  %s2 = inlined_call_operand.hbm [shape: f32[128,256], index: 2, kind: input, shape index: {}]
  %s3 = inlined_call_operand.vmem [shape: f32[1,256], index: 3, kind: input, shape index: {}]
  %s4 = inlined_call_operand.hbm [shape: f32[128,256], index: 4, kind: input, shape index: {}]
  %s5 = inlined_call_operand.vmem [shape: f32[1,256], index: 5, kind: input, shape index: {}]
  %s6 = inlined_call_operand.hbm [shape: f32[16,128], index: 6, kind: output, shape index: {}]
  %s7 = sld [smem:[#allocation0]]
  $region42: #{tpu_custom_call.1} parent=0
    _
  %s9 = ssub.s32 1, %s7
  %s10 = scalar_select 0, %s9, %s7
  $region1: #{tpu_custom_call.1} parent=0
    #allocation3 [shape = 'u8[131072]{0}', space=vmem, size = 0x20000, scoped, tag = 'input window, operand 2, single buffered']
    #allocation4 [shape = 's32[1]{0}', space=sflag, size = 0x4, scoped, tag = 'scoped memory for tpu_custom_call.1']
    #allocation5 [shape = 's32[1]{0}', space=sflag, size = 0x4, scoped, tag = 'scoped memory for tpu_custom_call.1']
    #allocation6 [shape = 'u8[131072]{0}', space=vmem, size = 0x20000, scoped, tag = 'input window, operand 4, single buffered']
    #allocation7 [shape = 's32[1]{0}', space=sflag, size = 0x4, scoped, tag = 'scoped memory for tpu_custom_call.1']
    #allocation8 [shape = 'u8[8192]{0}', space=vmem, size = 0x2000, scoped, tag = 'output window, operand 0, single buffered']
    %11 = vsyncpa [#allocation4], 0
    %12 = vsyncpa [#allocation7], 0
    %13 = vsyncpa [#allocation5], 0
    // Predicated region
    $region2: #{tpu_custom_call.1} parent=1 // pred_check
      _
    $region3: #{tpu_custom_call.1} parent=1 // pred_check_branch
      %15 = sbr.rel (0) target = $region5
    $region4: #{tpu_custom_call.1} parent=1 // pred_region
      _
    $region5: #{tpu_custom_call.1} parent=1 // pred_fallthru
      _
    // Predicated region
    $region6: #{tpu_custom_call.1} parent=1 // pred_check
      _
    $region7: #{tpu_custom_call.1} parent=1 // pred_check_branch
      %17 = sbr.rel (0) target = $region9
    $region8: #{tpu_custom_call.1} parent=1 // pred_region
      _
    $region9: #{tpu_custom_call.1} parent=1 // pred_fallthru
      _
    // Predicated region
    $region10: #{tpu_custom_call.1} parent=1 // pred_check
      _
    $region11: #{tpu_custom_call.1} parent=1 // pred_check_branch
      %19 = sbr.rel (0) target = $region13
    $region12: #{tpu_custom_call.1} parent=1 // pred_region
      %s21 = ssub.s32 4096, 4096
      %22 = vsyncadd [#allocation4], %s21
      %s23 = sshll.u32 [#allocation3], 4
      %s24 = int_to_ptr.vmem [resolvable:$true] %s23
      %29 = dma.hbm_to_vmem [thread:$0]  %s2, 4096, %s24, [#allocation4], 256, 256, 16
    $region13: #{tpu_custom_call.1} parent=1 // pred_fallthru
      _
    // Predicated region
    $region14: #{tpu_custom_call.1} parent=1 // pred_check
      _
    $region15: #{tpu_custom_call.1} parent=1 // pred_check_branch
      %31 = sbr.rel (0) target = $region17
    $region16: #{tpu_custom_call.1} parent=1 // pred_region
      _
    $region17: #{tpu_custom_call.1} parent=1 // pred_fallthru
      _
    // Predicated region
    $region18: #{tpu_custom_call.1} parent=1 // pred_check
      _
    $region19: #{tpu_custom_call.1} parent=1 // pred_check_branch
      %33 = sbr.rel (0) target = $region21
    $region20: #{tpu_custom_call.1} parent=1 // pred_region
      %s35 = ssub.s32 4096, 4096
      %36 = vsyncadd [#allocation7], %s35
      %s37 = sshll.u32 [#allocation6], 4
      %s38 = int_to_ptr.vmem [resolvable:$true] %s37
      %43 = dma.hbm_to_vmem [thread:$0]  %s4, 4096, %s38, [#allocation7], 256, 256, 16
    $region21: #{tpu_custom_call.1} parent=1 // pred_fallthru
      _
    // Predicated region
    $region22: #{tpu_custom_call.1} parent=1 // pred_check
      _
    $region23: #{tpu_custom_call.1} parent=1 // pred_check_branch
      %45 = sbr.rel (0) target = $region25
    $region24: #{tpu_custom_call.1} parent=1 // pred_region
      _
    $region25: #{tpu_custom_call.1} parent=1 // pred_fallthru
      _
    // Predicated region
    $region26: #{tpu_custom_call.1} parent=1 // pred_check
      _
    $region27: #{tpu_custom_call.1} parent=1 // pred_check_branch
      %47 = sbr.rel (0) target = $region29
    $region28: #{tpu_custom_call.1} parent=1 // pred_region
      %48 = dma.done [#allocation4], 4096
    $region29: #{tpu_custom_call.1} parent=1 // pred_fallthru
      _
    // Predicated region
    $region30: #{tpu_custom_call.1} parent=1 // pred_check
      _
    $region31: #{tpu_custom_call.1} parent=1 // pred_check_branch
      %50 = sbr.rel (0) target = $region33
    $region32: #{tpu_custom_call.1} parent=1 // pred_region
      %51 = dma.done [#allocation7], 4096
    $region33: #{tpu_custom_call.1} parent=1 // pred_fallthru
      _
    %v52 = vld [vmem:[%s0] sm:$0xff]
    %v53 = vld [vmem:[%s0 + $0x8] sm:$0xff]
    %v54 = vld [vmem:[%s0 + $0x10] sm:$0xff]
    %v55 = vld [vmem:[%s0 + $0x18] sm:$0xff]
    %v56 = vld [vmem:[%s0 + $0x20] sm:$0xff]
    %v57 = vld [vmem:[%s0 + $0x28] sm:$0xff]
    %v58 = vld [vmem:[%s0 + $0x30] sm:$0xff]
    %v59 = vld [vmem:[%s0 + $0x38] sm:$0xff]
    %v60 = vld [vmem:[%s0 + $0x40] sm:$0xff]
    %v61 = vld [vmem:[%s0 + $0x48] sm:$0xff]
    %v62 = vld [vmem:[%s0 + $0x50] sm:$0xff]
    %v63 = vld [vmem:[%s0 + $0x58] sm:$0xff]
    %v64 = vld [vmem:[%s0 + $0x60] sm:$0xff]
    %v65 = vld [vmem:[%s0 + $0x68] sm:$0xff]
    %v66 = vld [vmem:[%s0 + $0x70] sm:$0xff]
    %v67 = vld [vmem:[%s0 + $0x78] sm:$0xff]
    %v68 = vld [vmem:[#allocation3] sm:$0xff]
    %v69 = vld [vmem:[#allocation3 + $0x8] sm:$0xff]
    %v70 = vld [vmem:[#allocation3 + $0x10] sm:$0xff]
    %v71 = vld [vmem:[#allocation3 + $0x18] sm:$0xff]
    %v72 = vld [vmem:[#allocation3 + $0x20] sm:$0xff]
    %v73 = vld [vmem:[#allocation3 + $0x28] sm:$0xff]
    %v74 = vld [vmem:[#allocation3 + $0x30] sm:$0xff]
    %v75 = vld [vmem:[#allocation3 + $0x38] sm:$0xff]
    %v76 = vld [vmem:[#allocation3 + $0x40] sm:$0xff]
    %v77 = vld [vmem:[#allocation3 + $0x48] sm:$0xff]
    %v78 = vld [vmem:[#allocation3 + $0x50] sm:$0xff]
    %v79 = vld [vmem:[#allocation3 + $0x58] sm:$0xff]
    %v80 = vld [vmem:[#allocation3 + $0x60] sm:$0xff]
    %v81 = vld [vmem:[#allocation3 + $0x68] sm:$0xff]
    %v82 = vld [vmem:[#allocation3 + $0x70] sm:$0xff]
    %v83 = vld [vmem:[#allocation3 + $0x78] sm:$0xff]
    %v84 = vld [vmem:[#allocation3 + $0x80] sm:$0xff]
    %v85 = vld [vmem:[#allocation3 + $0x88] sm:$0xff]
    %v86 = vld [vmem:[#allocation3 + $0x90] sm:$0xff]
    %v87 = vld [vmem:[#allocation3 + $0x98] sm:$0xff]
    %v88 = vld [vmem:[#allocation3 + $0xa0] sm:$0xff]
    %v89 = vld [vmem:[#allocation3 + $0xa8] sm:$0xff]
    %v90 = vld [vmem:[#allocation3 + $0xb0] sm:$0xff]
    %v91 = vld [vmem:[#allocation3 + $0xb8] sm:$0xff]
    %v92 = vld [vmem:[#allocation3 + $0xc0] sm:$0xff]
    %v93 = vld [vmem:[#allocation3 + $0xc8] sm:$0xff]
    %v94 = vld [vmem:[#allocation3 + $0xd0] sm:$0xff]
    %v95 = vld [vmem:[#allocation3 + $0xd8] sm:$0xff]
    %v96 = vld [vmem:[#allocation3 + $0xe0] sm:$0xff]
    %v97 = vld [vmem:[#allocation3 + $0xe8] sm:$0xff]
    %v98 = vld [vmem:[#allocation3 + $0xf0] sm:$0xff]
    %v99 = vld [vmem:[#allocation3 + $0xf8] sm:$0xff]
    %v100 = vld [vmem:[%s3] sm:$0x3]
    %v102 = vlaneseq
    %v103 = vshrl.u32 %v102, 7
    %v104 = vsub.s32 0, %v103
    %v105 = vrot.slane %v100, %v104
    %v106 = vlaneseq
    %v107 = vshrl.u32 %v106, 7
    %v108 = vsub.s32 1, %v107
    %v109 = vrot.slane %v100, %v108
    %112 = vmatprep.subr.mxu0 %v69
    %113 = vmatpush1.msra.mxu0 %v68
    %114 = vmatprep.subr.mxu0 %v71
    %115 = vmatpush1.msra.mxu0 %v70
    %116 = vmatprep.subr.mxu0 %v73
    %117 = vmatpush1.msra.mxu0 %v72
    %118 = vmatprep.subr.mxu0 %v75
    %119 = vmatpush1.msra.mxu0 %v74
    %120 = vmatprep.subr.mxu0 %v77
    %121 = vmatpush1.msra.mxu0 %v76
    %122 = vmatprep.subr.mxu0 %v79
    %123 = vmatpush1.msra.mxu0 %v78
    %124 = vmatprep.subr.mxu0 %v81
    %125 = vmatpush1.msra.mxu0 %v80
    %126 = vmatprep.subr.mxu0 %v83
    %127 = vmatpush1.msra.mxu0 %v82
    %128 = vmatprep.subr.mxu0 %v85
    %129 = vmatpush1.msra.mxu0 %v84
    %130 = vmatprep.subr.mxu0 %v87
    %131 = vmatpush1.msra.mxu0 %v86
    %132 = vmatprep.subr.mxu0 %v89
    %133 = vmatpush1.msra.mxu0 %v88
    %134 = vmatprep.subr.mxu0 %v91
    %135 = vmatpush1.msra.mxu0 %v90
    %136 = vmatprep.subr.mxu0 %v93
    %137 = vmatpush1.msra.mxu0 %v92
    %138 = vmatprep.subr.mxu0 %v95
    %139 = vmatpush1.msra.mxu0 %v94
    %140 = vmatprep.subr.mxu0 %v97
    %141 = vmatpush1.msra.mxu0 %v96
    %142 = vmatprep.subr.mxu0 %v99
    %143 = vmatpush1.msra.mxu0 %v98
    %144 = vmatprep.subr.mxu0 0.0
    %145 = vmatpush1.msra.mxu0 0.0
    %146 = vmatprep.subr.mxu0 0.0
    %147 = vmatpush1.msra.mxu0 0.0
    %148 = vmatprep.subr.mxu0 0.0
    %149 = vmatpush1.msra.mxu0 0.0
    %150 = vmatprep.subr.mxu0 0.0
    %151 = vmatpush1.msra.mxu0 0.0
    %152 = vmatprep.subr.mxu0 0.0
    %153 = vmatpush1.msra.mxu0 0.0
    %154 = vmatprep.subr.mxu0 0.0
    %155 = vmatpush1.msra.mxu0 0.0
    %156 = vmatprep.subr.mxu0 0.0
    %157 = vmatpush1.msra.mxu0 0.0
    %158 = vmatprep.subr.mxu0 0.0
    %159 = vmatpush1.msra.mxu0 0.0
    %160 = vmatprep.subr.mxu0 0.0
    %161 = vmatpush1.msra.mxu0 0.0
    %162 = vmatprep.subr.mxu0 0.0
    %163 = vmatpush1.msra.mxu0 0.0
    %164 = vmatprep.subr.mxu0 0.0
    %165 = vmatpush1.msra.mxu0 0.0
    %166 = vmatprep.subr.mxu0 0.0
    %167 = vmatpush1.msra.mxu0 0.0
    %168 = vmatprep.subr.mxu0 0.0
    %169 = vmatpush1.msra.mxu0 0.0
    %170 = vmatprep.subr.mxu0 0.0
    %171 = vmatpush1.msra.mxu0 0.0
    %172 = vmatprep.subr.mxu0 0.0
    %173 = vmatpush1.msra.mxu0 0.0
    %174 = vmatprep.subr.mxu0 0.0
    %175 = vmatpush1.msra.mxu0 0.0
    %176 = vmatprep.mubr.f32.mxu0 0.0
    %177 = vmatmul.mubr.f32.gmra.mrb[0].mxu0 %v52
    %v178 = vpop.f32.mrb[0].mxu0
    %v179 = vadd.f32 %v105, %v178
    %v180 = vpop.f32.mrb[0].mxu0
    %v181 = vadd.f32 %v109, %v180
    %182 = vmatprep.mubr.f32.mxu0 0.0
    %183 = vmatmul.mubr.f32.gmra.mrb[0].mxu0 %v53
    %v184 = vpop.f32.mrb[0].mxu0
    %v185 = vadd.f32 %v105, %v184
    %v186 = vpop.f32.mrb[0].mxu0
    %v187 = vadd.f32 %v109, %v186
    %188 = vmatprep.mubr.f32.mxu0 0.0
    %189 = vmatmul.mubr.f32.gmra.mrb[0].mxu0 %v54
    %v190 = vpop.f32.mrb[0].mxu0
    %v191 = vadd.f32 %v105, %v190
    %v192 = vpop.f32.mrb[0].mxu0
    %v193 = vadd.f32 %v109, %v192
    %194 = vmatprep.mubr.f32.mxu0 0.0
    %195 = vmatmul.mubr.f32.gmra.mrb[0].mxu0 %v55
    %v196 = vpop.f32.mrb[0].mxu0
    %v197 = vadd.f32 %v105, %v196
    %v198 = vpop.f32.mrb[0].mxu0
    %v199 = vadd.f32 %v109, %v198
    %200 = vmatprep.mubr.f32.mxu0 0.0
    %201 = vmatmul.mubr.f32.gmra.mrb[0].mxu0 %v56
    %v202 = vpop.f32.mrb[0].mxu0
    %v203 = vadd.f32 %v105, %v202
    %v204 = vpop.f32.mrb[0].mxu0
    %v205 = vadd.f32 %v109, %v204
    %206 = vmatprep.mubr.f32.mxu0 0.0
    %207 = vmatmul.mubr.f32.gmra.mrb[0].mxu0 %v57
    %v208 = vpop.f32.mrb[0].mxu0
    %v209 = vadd.f32 %v105, %v208
    %v210 = vpop.f32.mrb[0].mxu0
    %v211 = vadd.f32 %v109, %v210
    %212 = vmatprep.mubr.f32.mxu0 0.0
    %213 = vmatmul.mubr.f32.gmra.mrb[0].mxu0 %v58
    %v214 = vpop.f32.mrb[0].mxu0
    %v215 = vadd.f32 %v105, %v214
    %v216 = vpop.f32.mrb[0].mxu0
    %v217 = vadd.f32 %v109, %v216
    %218 = vmatprep.mubr.f32.mxu0 0.0
    %219 = vmatmul.mubr.f32.gmra.mrb[0].mxu0 %v59
    %v220 = vpop.f32.mrb[0].mxu0
    %v221 = vadd.f32 %v105, %v220
    %v222 = vpop.f32.mrb[0].mxu0
    %v223 = vadd.f32 %v109, %v222
    %224 = vmatprep.mubr.f32.mxu0 0.0
    %225 = vmatmul.mubr.f32.gmra.mrb[0].mxu0 %v60
    %v226 = vpop.f32.mrb[0].mxu0
    %v227 = vadd.f32 %v105, %v226
    %v228 = vpop.f32.mrb[0].mxu0
    %v229 = vadd.f32 %v109, %v228
    %230 = vmatprep.mubr.f32.mxu0 0.0
    %231 = vmatmul.mubr.f32.gmra.mrb[0].mxu0 %v61
    %v232 = vpop.f32.mrb[0].mxu0
    %v233 = vadd.f32 %v105, %v232
    %v234 = vpop.f32.mrb[0].mxu0
    %v235 = vadd.f32 %v109, %v234
    %236 = vmatprep.mubr.f32.mxu0 0.0
    %237 = vmatmul.mubr.f32.gmra.mrb[0].mxu0 %v62
    %v238 = vpop.f32.mrb[0].mxu0
    %v239 = vadd.f32 %v105, %v238
    %v240 = vpop.f32.mrb[0].mxu0
    %v241 = vadd.f32 %v109, %v240
    %242 = vmatprep.mubr.f32.mxu0 0.0
    %243 = vmatmul.mubr.f32.gmra.mrb[0].mxu0 %v63
    %v244 = vpop.f32.mrb[0].mxu0
    %v245 = vadd.f32 %v105, %v244
    %v246 = vpop.f32.mrb[0].mxu0
    %v247 = vadd.f32 %v109, %v246
    %248 = vmatprep.mubr.f32.mxu0 0.0
    %249 = vmatmul.mubr.f32.gmra.mrb[0].mxu0 %v64
    %v250 = vpop.f32.mrb[0].mxu0
    %v251 = vadd.f32 %v105, %v250
    %v252 = vpop.f32.mrb[0].mxu0
    %v253 = vadd.f32 %v109, %v252
    %254 = vmatprep.mubr.f32.mxu0 0.0
    %255 = vmatmul.mubr.f32.gmra.mrb[0].mxu0 %v65
    %v256 = vpop.f32.mrb[0].mxu0
    %v257 = vadd.f32 %v105, %v256
    %v258 = vpop.f32.mrb[0].mxu0
    %v259 = vadd.f32 %v109, %v258
    %260 = vmatprep.mubr.f32.mxu0 0.0
    %261 = vmatmul.mubr.f32.gmra.mrb[0].mxu0 %v66
    %v262 = vpop.f32.mrb[0].mxu0
    %v263 = vadd.f32 %v105, %v262
    %v264 = vpop.f32.mrb[0].mxu0
    %v265 = vadd.f32 %v109, %v264
    %266 = vmatprep.mubr.f32.mxu0 0.0
    %267 = vmatmul.mubr.f32.gmra.mrb[0].mxu0 %v67
    %v268 = vpop.f32.mrb[0].mxu0
    %v269 = vadd.f32 %v105, %v268
    %v270 = vpop.f32.mrb[0].mxu0
    %v271 = vadd.f32 %v109, %v270
    %272 = vdwg.mxu0
    %273 = vst [vmem:[#allocation2] sm:$0xff] %v179
    %274 = vst [vmem:[#allocation2 + $0x8] sm:$0xff] %v181
    %275 = vst [vmem:[#allocation2 + $0x10] sm:$0xff] %v185
    %276 = vst [vmem:[#allocation2 + $0x18] sm:$0xff] %v187
    %277 = vst [vmem:[#allocation2 + $0x20] sm:$0xff] %v191
    %278 = vst [vmem:[#allocation2 + $0x28] sm:$0xff] %v193
    %279 = vst [vmem:[#allocation2 + $0x30] sm:$0xff] %v197
    %280 = vst [vmem:[#allocation2 + $0x38] sm:$0xff] %v199
    %281 = vst [vmem:[#allocation2 + $0x40] sm:$0xff] %v203
    %282 = vst [vmem:[#allocation2 + $0x48] sm:$0xff] %v205
    %283 = vst [vmem:[#allocation2 + $0x50] sm:$0xff] %v209
    %284 = vst [vmem:[#allocation2 + $0x58] sm:$0xff] %v211
    %285 = vst [vmem:[#allocation2 + $0x60] sm:$0xff] %v215
    %286 = vst [vmem:[#allocation2 + $0x68] sm:$0xff] %v217
    %287 = vst [vmem:[#allocation2 + $0x70] sm:$0xff] %v221
    %288 = vst [vmem:[#allocation2 + $0x78] sm:$0xff] %v223
    %289 = vst [vmem:[#allocation2 + $0x80] sm:$0xff] %v227
    %290 = vst [vmem:[#allocation2 + $0x88] sm:$0xff] %v229
    %291 = vst [vmem:[#allocation2 + $0x90] sm:$0xff] %v233
    %292 = vst [vmem:[#allocation2 + $0x98] sm:$0xff] %v235
    %293 = vst [vmem:[#allocation2 + $0xa0] sm:$0xff] %v239
    %294 = vst [vmem:[#allocation2 + $0xa8] sm:$0xff] %v241
    %295 = vst [vmem:[#allocation2 + $0xb0] sm:$0xff] %v245
    %296 = vst [vmem:[#allocation2 + $0xb8] sm:$0xff] %v247
    %297 = vst [vmem:[#allocation2 + $0xc0] sm:$0xff] %v251
    %298 = vst [vmem:[#allocation2 + $0xc8] sm:$0xff] %v253
    %299 = vst [vmem:[#allocation2 + $0xd0] sm:$0xff] %v257
    %300 = vst [vmem:[#allocation2 + $0xd8] sm:$0xff] %v259
    %301 = vst [vmem:[#allocation2 + $0xe0] sm:$0xff] %v263
    %302 = vst [vmem:[#allocation2 + $0xe8] sm:$0xff] %v265
    %303 = vst [vmem:[#allocation2 + $0xf0] sm:$0xff] %v269
    %304 = vst [vmem:[#allocation2 + $0xf8] sm:$0xff] %v271
    %v305 = vld [vmem:[#allocation6] sm:$0xff]
    %v306 = vld [vmem:[#allocation6 + $0x8] sm:$0xff]
    %v307 = vld [vmem:[#allocation6 + $0x10] sm:$0xff]
    %v308 = vld [vmem:[#allocation6 + $0x18] sm:$0xff]
    %v309 = vld [vmem:[#allocation6 + $0x20] sm:$0xff]
    %v310 = vld [vmem:[#allocation6 + $0x28] sm:$0xff]
    %v311 = vld [vmem:[#allocation6 + $0x30] sm:$0xff]
    %v312 = vld [vmem:[#allocation6 + $0x38] sm:$0xff]
    %v313 = vld [vmem:[#allocation6 + $0x40] sm:$0xff]
    %v314 = vld [vmem:[#allocation6 + $0x48] sm:$0xff]
    %v315 = vld [vmem:[#allocation6 + $0x50] sm:$0xff]
    %v316 = vld [vmem:[#allocation6 + $0x58] sm:$0xff]
    %v317 = vld [vmem:[#allocation6 + $0x60] sm:$0xff]
    %v318 = vld [vmem:[#allocation6 + $0x68] sm:$0xff]
    %v319 = vld [vmem:[#allocation6 + $0x70] sm:$0xff]
    %v320 = vld [vmem:[#allocation6 + $0x78] sm:$0xff]
    %v321 = vld [vmem:[#allocation6 + $0x80] sm:$0xff]
    %v322 = vld [vmem:[#allocation6 + $0x88] sm:$0xff]
    %v323 = vld [vmem:[#allocation6 + $0x90] sm:$0xff]
    %v324 = vld [vmem:[#allocation6 + $0x98] sm:$0xff]
    %v325 = vld [vmem:[#allocation6 + $0xa0] sm:$0xff]
    %v326 = vld [vmem:[#allocation6 + $0xa8] sm:$0xff]
    %v327 = vld [vmem:[#allocation6 + $0xb0] sm:$0xff]
    %v328 = vld [vmem:[#allocation6 + $0xb8] sm:$0xff]
    %v329 = vld [vmem:[#allocation6 + $0xc0] sm:$0xff]
    %v330 = vld [vmem:[#allocation6 + $0xc8] sm:$0xff]
    %v331 = vld [vmem:[#allocation6 + $0xd0] sm:$0xff]
    %v332 = vld [vmem:[#allocation6 + $0xd8] sm:$0xff]
    %v333 = vld [vmem:[#allocation6 + $0xe0] sm:$0xff]
    %v334 = vld [vmem:[#allocation6 + $0xe8] sm:$0xff]
    %v335 = vld [vmem:[#allocation6 + $0xf0] sm:$0xff]
    %v336 = vld [vmem:[#allocation6 + $0xf8] sm:$0xff]
    %v337 = vld [vmem:[%s5] sm:$0x3]
    %v339 = vlaneseq
    %v340 = vshrl.u32 %v339, 7
    %v341 = vsub.s32 0, %v340
    %v342 = vrot.slane %v337, %v341
    %v343 = vlaneseq
    %v344 = vshrl.u32 %v343, 7
    %v345 = vsub.s32 1, %v344
    %v346 = vrot.slane %v337, %v345
    %s349 = smul.u32 0, 2
    %s350 = smul.addr %s349, 8
    %s351 = scalar_lea.vmem [#allocation2], %s350
    %v352 = vld [vmem:[%s351] sm:$0xff]
    %v353 = vld [vmem:[%s351 + $0x8] sm:$0xff]
    %v354 = vld [vmem:[%s351 + $0x10] sm:$0xff]
    %v355 = vld [vmem:[%s351 + $0x18] sm:$0xff]
    %356 = vmatprep.subr.mxu0 %v306
    %357 = vmatpush1.msra.mxu0 %v305
    %358 = vmatprep.subr.mxu0 %v308
    %359 = vmatpush1.msra.mxu0 %v307
    %360 = vmatprep.subr.mxu0 %v310
    %361 = vmatpush1.msra.mxu0 %v309
    %362 = vmatprep.subr.mxu0 %v312
    %363 = vmatpush1.msra.mxu0 %v311
    %364 = vmatprep.subr.mxu0 %v314
    %365 = vmatpush1.msra.mxu0 %v313
    %366 = vmatprep.subr.mxu0 %v316
    %367 = vmatpush1.msra.mxu0 %v315
    %368 = vmatprep.subr.mxu0 %v318
    %369 = vmatpush1.msra.mxu0 %v317
    %370 = vmatprep.subr.mxu0 %v320
    %371 = vmatpush1.msra.mxu0 %v319
    %372 = vmatprep.subr.mxu0 %v322
    %373 = vmatpush1.msra.mxu0 %v321
    %374 = vmatprep.subr.mxu0 %v324
    %375 = vmatpush1.msra.mxu0 %v323
    %376 = vmatprep.subr.mxu0 %v326
    %377 = vmatpush1.msra.mxu0 %v325
    %378 = vmatprep.subr.mxu0 %v328
    %379 = vmatpush1.msra.mxu0 %v327
    %380 = vmatprep.subr.mxu0 %v330
    %381 = vmatpush1.msra.mxu0 %v329
    %382 = vmatprep.subr.mxu0 %v332
    %383 = vmatpush1.msra.mxu0 %v331
    %384 = vmatprep.subr.mxu0 %v334
    %385 = vmatpush1.msra.mxu0 %v333
    %386 = vmatprep.subr.mxu0 %v336
    %387 = vmatpush1.msra.mxu0 %v335
    %388 = vmatprep.subr.mxu0 0.0
    %389 = vmatpush1.msra.mxu0 0.0
    %390 = vmatprep.subr.mxu0 0.0
    %391 = vmatpush1.msra.mxu0 0.0
    %392 = vmatprep.subr.mxu0 0.0
    %393 = vmatpush1.msra.mxu0 0.0
    %394 = vmatprep.subr.mxu0 0.0
    %395 = vmatpush1.msra.mxu0 0.0
    %396 = vmatprep.subr.mxu0 0.0
    %397 = vmatpush1.msra.mxu0 0.0
    %398 = vmatprep.subr.mxu0 0.0
    %399 = vmatpush1.msra.mxu0 0.0
    %400 = vmatprep.subr.mxu0 0.0
    %401 = vmatpush1.msra.mxu0 0.0
    %402 = vmatprep.subr.mxu0 0.0
    %403 = vmatpush1.msra.mxu0 0.0
    %404 = vmatprep.subr.mxu0 0.0
    %405 = vmatpush1.msra.mxu0 0.0
    %406 = vmatprep.subr.mxu0 0.0
    %407 = vmatpush1.msra.mxu0 0.0
    %408 = vmatprep.subr.mxu0 0.0
    %409 = vmatpush1.msra.mxu0 0.0
    %410 = vmatprep.subr.mxu0 0.0
    %411 = vmatpush1.msra.mxu0 0.0
    %412 = vmatprep.subr.mxu0 0.0
    %413 = vmatpush1.msra.mxu0 0.0
    %414 = vmatprep.subr.mxu0 0.0
    %415 = vmatpush1.msra.mxu0 0.0
    %416 = vmatprep.subr.mxu0 0.0
    %417 = vmatpush1.msra.mxu0 0.0
    %418 = vmatprep.subr.mxu0 0.0
    %419 = vmatpush1.msra.mxu0 0.0
    %420 = vmatprep.mubr.f32.mxu0 0.0
    %421 = vmatmul.mubr.f32.gmra.mrb[0].mxu0 0.0
    %v422 = vpop.f32.mrb[0].mxu0
    %v423 = vadd.f32 %v342, %v422
    %v424 = vpop.f32.mrb[0].mxu0
    %v425 = vadd.f32 %v346, %v424
    %426 = vmatprep.mubr.f32.mxu0 0.0
    %427 = vmatmul.mubr.f32.gmra.mrb[0].mxu0 0.0
    %v428 = vpop.f32.mrb[0].mxu0
    %v429 = vadd.f32 %v342, %v428
    %v430 = vpop.f32.mrb[0].mxu0
    %v431 = vadd.f32 %v346, %v430
    %432 = vdwg.mxu0
    %v433 = vadd.f32 %v352, %v423
    %v434 = vadd.f32 %v354, %v429
    %v435 = vxor.u32 %v433, 2147483648
    %v436 = vxor.u32 %v434, 2147483648
    %v437 = vmul.f32 %v435, 1.442695
    %v438 = vpow.pop %v437
    %v439 = vmul.f32 %v436, 1.442695
    %v440 = vpow.pop %v439
    %v441 = vadd.f32 %v438, 1.0
    %v442 = vadd.f32 %v440, 1.0
    %v443 = vrcp.pop %v441
    %v444 = vmul.f32 1.0, %v443
    %v445 = vrcp.pop %v442
    %v446 = vmul.f32 1.0, %v445
    %v447 = vmul.f32 %v444, %v425
    %v448 = vmul.f32 %v446, %v431
    %v449 = vadd.f32 %v353, %v447
    %v450 = vadd.f32 %v355, %v448
    %v451 = vtanh.pop %v449
    %v452 = vtanh.pop %v450
    %v453 = vld [vmem:[%s1] sm:$0xff]
    %v454 = vld [vmem:[%s1 + $0x8] sm:$0xff]
    %456 = vset.pattern.permute.xlu0 0
    %457 = vperm.xlu0 %456, %v453
    %v458 = vpop.permute.xlu0 %457
    %461 = vset.pattern.permute.xlu0 0
    %462 = vperm.xlu0 %461, %v454
    %v463 = vpop.permute.xlu0 %462
    %v465 = vmul.f32 %v458, %v451
    %v466 = vmul.f32 %v463, %v452
    %v467 = vadd.f32 %v465, 0.0
    %v468 = vadd.f32 %v466, 0.0
    %s469 = smul.u32 2, 2
    %s470 = smul.addr %s469, 8
    %s471 = scalar_lea.vmem [#allocation2], %s470
    %v472 = vld [vmem:[%s471] sm:$0xff]
    %v473 = vld [vmem:[%s471 + $0x8] sm:$0xff]
    %v474 = vld [vmem:[%s471 + $0x10] sm:$0xff]
    %v475 = vld [vmem:[%s471 + $0x18] sm:$0xff]
    %476 = vmatprep.subr.mxu0 %v306
    %477 = vmatpush1.msra.mxu0 %v305
    %478 = vmatprep.subr.mxu0 %v308
    %479 = vmatpush1.msra.mxu0 %v307
    %480 = vmatprep.subr.mxu0 %v310
    %481 = vmatpush1.msra.mxu0 %v309
    %482 = vmatprep.subr.mxu0 %v312
    %483 = vmatpush1.msra.mxu0 %v311
    %484 = vmatprep.subr.mxu0 %v314
    %485 = vmatpush1.msra.mxu0 %v313
    %486 = vmatprep.subr.mxu0 %v316
    %487 = vmatpush1.msra.mxu0 %v315
    %488 = vmatprep.subr.mxu0 %v318
    %489 = vmatpush1.msra.mxu0 %v317
    %490 = vmatprep.subr.mxu0 %v320
    %491 = vmatpush1.msra.mxu0 %v319
    %492 = vmatprep.subr.mxu0 %v322
    %493 = vmatpush1.msra.mxu0 %v321
    %494 = vmatprep.subr.mxu0 %v324
    %495 = vmatpush1.msra.mxu0 %v323
    %496 = vmatprep.subr.mxu0 %v326
    %497 = vmatpush1.msra.mxu0 %v325
    %498 = vmatprep.subr.mxu0 %v328
    %499 = vmatpush1.msra.mxu0 %v327
    %500 = vmatprep.subr.mxu0 %v330
    %501 = vmatpush1.msra.mxu0 %v329
    %502 = vmatprep.subr.mxu0 %v332
    %503 = vmatpush1.msra.mxu0 %v331
    %504 = vmatprep.subr.mxu0 %v334
    %505 = vmatpush1.msra.mxu0 %v333
    %506 = vmatprep.subr.mxu0 %v336
    %507 = vmatpush1.msra.mxu0 %v335
    %508 = vmatprep.subr.mxu0 0.0
    %509 = vmatpush1.msra.mxu0 0.0
    %510 = vmatprep.subr.mxu0 0.0
    %511 = vmatpush1.msra.mxu0 0.0
    %512 = vmatprep.subr.mxu0 0.0
    %513 = vmatpush1.msra.mxu0 0.0
    %514 = vmatprep.subr.mxu0 0.0
    %515 = vmatpush1.msra.mxu0 0.0
    %516 = vmatprep.subr.mxu0 0.0
    %517 = vmatpush1.msra.mxu0 0.0
    %518 = vmatprep.subr.mxu0 0.0
    %519 = vmatpush1.msra.mxu0 0.0
    %520 = vmatprep.subr.mxu0 0.0
    %521 = vmatpush1.msra.mxu0 0.0
    %522 = vmatprep.subr.mxu0 0.0
    %523 = vmatpush1.msra.mxu0 0.0
    %524 = vmatprep.subr.mxu0 0.0
    %525 = vmatpush1.msra.mxu0 0.0
    %526 = vmatprep.subr.mxu0 0.0
    %527 = vmatpush1.msra.mxu0 0.0
    %528 = vmatprep.subr.mxu0 0.0
    %529 = vmatpush1.msra.mxu0 0.0
    %530 = vmatprep.subr.mxu0 0.0
    %531 = vmatpush1.msra.mxu0 0.0
    %532 = vmatprep.subr.mxu0 0.0
    %533 = vmatpush1.msra.mxu0 0.0
    %534 = vmatprep.subr.mxu0 0.0
    %535 = vmatpush1.msra.mxu0 0.0
    %536 = vmatprep.subr.mxu0 0.0
    %537 = vmatpush1.msra.mxu0 0.0
    %538 = vmatprep.subr.mxu0 0.0
    %539 = vmatpush1.msra.mxu0 0.0
    %540 = vmatprep.mubr.f32.mxu0 0.0
    %541 = vmatmul.mubr.f32.gmra.mrb[0].mxu0 %v467
    %v542 = vpop.f32.mrb[0].mxu0
    %v543 = vadd.f32 %v342, %v542
    %v544 = vpop.f32.mrb[0].mxu0
    %v545 = vadd.f32 %v346, %v544
    %546 = vmatprep.mubr.f32.mxu0 0.0
    %547 = vmatmul.mubr.f32.gmra.mrb[0].mxu0 %v468
    %v548 = vpop.f32.mrb[0].mxu0
    %v549 = vadd.f32 %v342, %v548
    %v550 = vpop.f32.mrb[0].mxu0
    %v551 = vadd.f32 %v346, %v550
    %552 = vdwg.mxu0
    %v553 = vadd.f32 %v472, %v543
    %v554 = vadd.f32 %v474, %v549
    %v555 = vxor.u32 %v553, 2147483648
    %v556 = vxor.u32 %v554, 2147483648
    %v557 = vmul.f32 %v555, 1.442695
    %v558 = vpow.pop %v557
    %v559 = vmul.f32 %v556, 1.442695
    %v560 = vpow.pop %v559
    %v561 = vadd.f32 %v558, 1.0
    %v562 = vadd.f32 %v560, 1.0
    %v563 = vrcp.pop %v561
    %v564 = vmul.f32 1.0, %v563
    %v565 = vrcp.pop %v562
    %v566 = vmul.f32 1.0, %v565
    %v567 = vmul.f32 %v564, %v545
    %v568 = vmul.f32 %v566, %v551
    %v569 = vadd.f32 %v473, %v567
    %v570 = vadd.f32 %v475, %v568
    %v571 = vtanh.pop %v569
    %v572 = vtanh.pop %v570
    %s573 = scalar_lea.vmem %s1, 16
    %v574 = vld [vmem:[%s573] sm:$0xff]
    %v575 = vld [vmem:[%s573 + $0x8] sm:$0xff]
    %v576 = vsub.f32 %v571, %v467
    %v577 = vsub.f32 %v572, %v468
    %579 = vset.pattern.permute.xlu0 0
    %580 = vperm.xlu0 %579, %v574
    %v581 = vpop.permute.xlu0 %580
    %584 = vset.pattern.permute.xlu0 0
    %585 = vperm.xlu0 %584, %v575
    %v586 = vpop.permute.xlu0 %585
    %v588 = vmul.f32 %v581, %v576
    %v589 = vmul.f32 %v586, %v577
    %v590 = vadd.f32 %v467, %v588
    %v591 = vadd.f32 %v468, %v589
    %s592 = smul.u32 4, 2
    %s593 = smul.addr %s592, 8
    %s594 = scalar_lea.vmem [#allocation2], %s593
    %v595 = vld [vmem:[%s594] sm:$0xff]
    %v596 = vld [vmem:[%s594 + $0x8] sm:$0xff]
    %v597 = vld [vmem:[%s594 + $0x10] sm:$0xff]
    %v598 = vld [vmem:[%s594 + $0x18] sm:$0xff]
    %599 = vmatprep.subr.mxu0 %v306
    %600 = vmatpush1.msra.mxu0 %v305
    %601 = vmatprep.subr.mxu0 %v308
    %602 = vmatpush1.msra.mxu0 %v307
    %603 = vmatprep.subr.mxu0 %v310
    %604 = vmatpush1.msra.mxu0 %v309
    %605 = vmatprep.subr.mxu0 %v312
    %606 = vmatpush1.msra.mxu0 %v311
    %607 = vmatprep.subr.mxu0 %v314
    %608 = vmatpush1.msra.mxu0 %v313
    %609 = vmatprep.subr.mxu0 %v316
    %610 = vmatpush1.msra.mxu0 %v315
    %611 = vmatprep.subr.mxu0 %v318
    %612 = vmatpush1.msra.mxu0 %v317
    %613 = vmatprep.subr.mxu0 %v320
    %614 = vmatpush1.msra.mxu0 %v319
    %615 = vmatprep.subr.mxu0 %v322
    %616 = vmatpush1.msra.mxu0 %v321
    %617 = vmatprep.subr.mxu0 %v324
    %618 = vmatpush1.msra.mxu0 %v323
    %619 = vmatprep.subr.mxu0 %v326
    %620 = vmatpush1.msra.mxu0 %v325
    %621 = vmatprep.subr.mxu0 %v328
    %622 = vmatpush1.msra.mxu0 %v327
    %623 = vmatprep.subr.mxu0 %v330
    %624 = vmatpush1.msra.mxu0 %v329
    %625 = vmatprep.subr.mxu0 %v332
    %626 = vmatpush1.msra.mxu0 %v331
    %627 = vmatprep.subr.mxu0 %v334
    %628 = vmatpush1.msra.mxu0 %v333
    %629 = vmatprep.subr.mxu0 %v336
    %630 = vmatpush1.msra.mxu0 %v335
    %631 = vmatprep.subr.mxu0 0.0
    %632 = vmatpush1.msra.mxu0 0.0
    %633 = vmatprep.subr.mxu0 0.0
    %634 = vmatpush1.msra.mxu0 0.0
    %635 = vmatprep.subr.mxu0 0.0
    %636 = vmatpush1.msra.mxu0 0.0
    %637 = vmatprep.subr.mxu0 0.0
    %638 = vmatpush1.msra.mxu0 0.0
    %639 = vmatprep.subr.mxu0 0.0
    %640 = vmatpush1.msra.mxu0 0.0
    %641 = vmatprep.subr.mxu0 0.0
    %642 = vmatpush1.msra.mxu0 0.0
    %643 = vmatprep.subr.mxu0 0.0
    %644 = vmatpush1.msra.mxu0 0.0
    %645 = vmatprep.subr.mxu0 0.0
    %646 = vmatpush1.msra.mxu0 0.0
    %647 = vmatprep.subr.mxu0 0.0
    %648 = vmatpush1.msra.mxu0 0.0
    %649 = vmatprep.subr.mxu0 0.0
    %650 = vmatpush1.msra.mxu0 0.0
    %651 = vmatprep.subr.mxu0 0.0
    %652 = vmatpush1.msra.mxu0 0.0
    %653 = vmatprep.subr.mxu0 0.0
    %654 = vmatpush1.msra.mxu0 0.0
    %655 = vmatprep.subr.mxu0 0.0
    %656 = vmatpush1.msra.mxu0 0.0
    %657 = vmatprep.subr.mxu0 0.0
    %658 = vmatpush1.msra.mxu0 0.0
    %659 = vmatprep.subr.mxu0 0.0
    %660 = vmatpush1.msra.mxu0 0.0
    %661 = vmatprep.subr.mxu0 0.0
    %662 = vmatpush1.msra.mxu0 0.0
    %663 = vmatprep.mubr.f32.mxu0 0.0
    %664 = vmatmul.mubr.f32.gmra.mrb[0].mxu0 %v590
    %v665 = vpop.f32.mrb[0].mxu0
    %v666 = vadd.f32 %v342, %v665
    %v667 = vpop.f32.mrb[0].mxu0
    %v668 = vadd.f32 %v346, %v667
    %669 = vmatprep.mubr.f32.mxu0 0.0
    %670 = vmatmul.mubr.f32.gmra.mrb[0].mxu0 %v591
    %v671 = vpop.f32.mrb[0].mxu0
    %v672 = vadd.f32 %v342, %v671
    %v673 = vpop.f32.mrb[0].mxu0
    %v674 = vadd.f32 %v346, %v673
    %675 = vdwg.mxu0
    %v676 = vadd.f32 %v595, %v666
    %v677 = vadd.f32 %v597, %v672
    %v678 = vxor.u32 %v676, 2147483648
    %v679 = vxor.u32 %v677, 2147483648
    %v680 = vmul.f32 %v678, 1.442695
    %v681 = vpow.pop %v680
    %v682 = vmul.f32 %v679, 1.442695
    %v683 = vpow.pop %v682
    %v684 = vadd.f32 %v681, 1.0
    %v685 = vadd.f32 %v683, 1.0
    %v686 = vrcp.pop %v684
    %v687 = vmul.f32 1.0, %v686
    %v688 = vrcp.pop %v685
    %v689 = vmul.f32 1.0, %v688
    %v690 = vmul.f32 %v687, %v668
    %v691 = vmul.f32 %v689, %v674
    %v692 = vadd.f32 %v596, %v690
    %v693 = vadd.f32 %v598, %v691
    %v694 = vtanh.pop %v692
    %v695 = vtanh.pop %v693
    %s696 = scalar_lea.vmem %s1, 32
    %v697 = vld [vmem:[%s696] sm:$0xff]
    %v698 = vld [vmem:[%s696 + $0x8] sm:$0xff]
    %v699 = vsub.f32 %v694, %v590
    %v700 = vsub.f32 %v695, %v591
    %702 = vset.pattern.permute.xlu0 0
    %703 = vperm.xlu0 %702, %v697
    %v704 = vpop.permute.xlu0 %703
    %707 = vset.pattern.permute.xlu0 0
    %708 = vperm.xlu0 %707, %v698
    %v709 = vpop.permute.xlu0 %708
    %v711 = vmul.f32 %v704, %v699
    %v712 = vmul.f32 %v709, %v700
    %v713 = vadd.f32 %v590, %v711
    %v714 = vadd.f32 %v591, %v712
    %s715 = smul.u32 6, 2
    %s716 = smul.addr %s715, 8
    %s717 = scalar_lea.vmem [#allocation2], %s716
    %v718 = vld [vmem:[%s717] sm:$0xff]
    %v719 = vld [vmem:[%s717 + $0x8] sm:$0xff]
    %v720 = vld [vmem:[%s717 + $0x10] sm:$0xff]
    %v721 = vld [vmem:[%s717 + $0x18] sm:$0xff]
    %722 = vmatprep.subr.mxu0 %v306
    %723 = vmatpush1.msra.mxu0 %v305
    %724 = vmatprep.subr.mxu0 %v308
    %725 = vmatpush1.msra.mxu0 %v307
    %726 = vmatprep.subr.mxu0 %v310
    %727 = vmatpush1.msra.mxu0 %v309
    %728 = vmatprep.subr.mxu0 %v312
    %729 = vmatpush1.msra.mxu0 %v311
    %730 = vmatprep.subr.mxu0 %v314
    %731 = vmatpush1.msra.mxu0 %v313
    %732 = vmatprep.subr.mxu0 %v316
    %733 = vmatpush1.msra.mxu0 %v315
    %734 = vmatprep.subr.mxu0 %v318
    %735 = vmatpush1.msra.mxu0 %v317
    %736 = vmatprep.subr.mxu0 %v320
    %737 = vmatpush1.msra.mxu0 %v319
    %738 = vmatprep.subr.mxu0 %v322
    %739 = vmatpush1.msra.mxu0 %v321
    %740 = vmatprep.subr.mxu0 %v324
    %741 = vmatpush1.msra.mxu0 %v323
    %742 = vmatprep.subr.mxu0 %v326
    %743 = vmatpush1.msra.mxu0 %v325
    %744 = vmatprep.subr.mxu0 %v328
    %745 = vmatpush1.msra.mxu0 %v327
    %746 = vmatprep.subr.mxu0 %v330
    %747 = vmatpush1.msra.mxu0 %v329
    %748 = vmatprep.subr.mxu0 %v332
    %749 = vmatpush1.msra.mxu0 %v331
    %750 = vmatprep.subr.mxu0 %v334
    %751 = vmatpush1.msra.mxu0 %v333
    %752 = vmatprep.subr.mxu0 %v336
    %753 = vmatpush1.msra.mxu0 %v335
    %754 = vmatprep.subr.mxu0 0.0
    %755 = vmatpush1.msra.mxu0 0.0
    %756 = vmatprep.subr.mxu0 0.0
    %757 = vmatpush1.msra.mxu0 0.0
    %758 = vmatprep.subr.mxu0 0.0
    %759 = vmatpush1.msra.mxu0 0.0
    %760 = vmatprep.subr.mxu0 0.0
    %761 = vmatpush1.msra.mxu0 0.0
    %762 = vmatprep.subr.mxu0 0.0
    %763 = vmatpush1.msra.mxu0 0.0
    %764 = vmatprep.subr.mxu0 0.0
    %765 = vmatpush1.msra.mxu0 0.0
    %766 = vmatprep.subr.mxu0 0.0
    %767 = vmatpush1.msra.mxu0 0.0
    %768 = vmatprep.subr.mxu0 0.0
    %769 = vmatpush1.msra.mxu0 0.0
    %770 = vmatprep.subr.mxu0 0.0
    %771 = vmatpush1.msra.mxu0 0.0
    %772 = vmatprep.subr.mxu0 0.0
    %773 = vmatpush1.msra.mxu0 0.0
    %774 = vmatprep.subr.mxu0 0.0
    %775 = vmatpush1.msra.mxu0 0.0
    %776 = vmatprep.subr.mxu0 0.0
    %777 = vmatpush1.msra.mxu0 0.0
    %778 = vmatprep.subr.mxu0 0.0
    %779 = vmatpush1.msra.mxu0 0.0
    %780 = vmatprep.subr.mxu0 0.0
    %781 = vmatpush1.msra.mxu0 0.0
    %782 = vmatprep.subr.mxu0 0.0
    %783 = vmatpush1.msra.mxu0 0.0
    %784 = vmatprep.subr.mxu0 0.0
    %785 = vmatpush1.msra.mxu0 0.0
    %786 = vmatprep.mubr.f32.mxu0 0.0
    %787 = vmatmul.mubr.f32.gmra.mrb[0].mxu0 %v713
    %v788 = vpop.f32.mrb[0].mxu0
    %v789 = vadd.f32 %v342, %v788
    %v790 = vpop.f32.mrb[0].mxu0
    %v791 = vadd.f32 %v346, %v790
    %792 = vmatprep.mubr.f32.mxu0 0.0
    %793 = vmatmul.mubr.f32.gmra.mrb[0].mxu0 %v714
    %v794 = vpop.f32.mrb[0].mxu0
    %v795 = vadd.f32 %v342, %v794
    %v796 = vpop.f32.mrb[0].mxu0
    %v797 = vadd.f32 %v346, %v796
    %798 = vdwg.mxu0
    %v799 = vadd.f32 %v718, %v789
    %v800 = vadd.f32 %v720, %v795
    %v801 = vxor.u32 %v799, 2147483648
    %v802 = vxor.u32 %v800, 2147483648
    %v803 = vmul.f32 %v801, 1.442695
    %v804 = vpow.pop %v803
    %v805 = vmul.f32 %v802, 1.442695
    %v806 = vpow.pop %v805
    %v807 = vadd.f32 %v804, 1.0
    %v808 = vadd.f32 %v806, 1.0
    %v809 = vrcp.pop %v807
    %v810 = vmul.f32 1.0, %v809
    %v811 = vrcp.pop %v808
    %v812 = vmul.f32 1.0, %v811
    %v813 = vmul.f32 %v810, %v791
    %v814 = vmul.f32 %v812, %v797
    %v815 = vadd.f32 %v719, %v813
    %v816 = vadd.f32 %v721, %v814
    %v817 = vtanh.pop %v815
    %v818 = vtanh.pop %v816
    %s819 = scalar_lea.vmem %s1, 48
    %v820 = vld [vmem:[%s819] sm:$0xff]
    %v821 = vld [vmem:[%s819 + $0x8] sm:$0xff]
    %v822 = vsub.f32 %v817, %v713
    %v823 = vsub.f32 %v818, %v714
    %825 = vset.pattern.permute.xlu0 0
    %826 = vperm.xlu0 %825, %v820
    %v827 = vpop.permute.xlu0 %826
    %830 = vset.pattern.permute.xlu0 0
    %831 = vperm.xlu0 %830, %v821
    %v832 = vpop.permute.xlu0 %831
    %v834 = vmul.f32 %v827, %v822
    %v835 = vmul.f32 %v832, %v823
    %v836 = vadd.f32 %v713, %v834
    %v837 = vadd.f32 %v714, %v835
    %s838 = smul.u32 8, 2
    %s839 = smul.addr %s838, 8
    %s840 = scalar_lea.vmem [#allocation2], %s839
    %v841 = vld [vmem:[%s840] sm:$0xff]
    %v842 = vld [vmem:[%s840 + $0x8] sm:$0xff]
    %v843 = vld [vmem:[%s840 + $0x10] sm:$0xff]
    %v844 = vld [vmem:[%s840 + $0x18] sm:$0xff]
    %845 = vmatprep.subr.mxu0 %v306
    %846 = vmatpush1.msra.mxu0 %v305
    %847 = vmatprep.subr.mxu0 %v308
    %848 = vmatpush1.msra.mxu0 %v307
    %849 = vmatprep.subr.mxu0 %v310
    %850 = vmatpush1.msra.mxu0 %v309
    %851 = vmatprep.subr.mxu0 %v312
    %852 = vmatpush1.msra.mxu0 %v311
    %853 = vmatprep.subr.mxu0 %v314
    %854 = vmatpush1.msra.mxu0 %v313
    %855 = vmatprep.subr.mxu0 %v316
    %856 = vmatpush1.msra.mxu0 %v315
    %857 = vmatprep.subr.mxu0 %v318
    %858 = vmatpush1.msra.mxu0 %v317
    %859 = vmatprep.subr.mxu0 %v320
    %860 = vmatpush1.msra.mxu0 %v319
    %861 = vmatprep.subr.mxu0 %v322
    %862 = vmatpush1.msra.mxu0 %v321
    %863 = vmatprep.subr.mxu0 %v324
    %864 = vmatpush1.msra.mxu0 %v323
    %865 = vmatprep.subr.mxu0 %v326
    %866 = vmatpush1.msra.mxu0 %v325
    %867 = vmatprep.subr.mxu0 %v328
    %868 = vmatpush1.msra.mxu0 %v327
    %869 = vmatprep.subr.mxu0 %v330
    %870 = vmatpush1.msra.mxu0 %v329
    %871 = vmatprep.subr.mxu0 %v332
    %872 = vmatpush1.msra.mxu0 %v331
    %873 = vmatprep.subr.mxu0 %v334
    %874 = vmatpush1.msra.mxu0 %v333
    %875 = vmatprep.subr.mxu0 %v336
    %876 = vmatpush1.msra.mxu0 %v335
    %877 = vmatprep.subr.mxu0 0.0
    %878 = vmatpush1.msra.mxu0 0.0
    %879 = vmatprep.subr.mxu0 0.0
    %880 = vmatpush1.msra.mxu0 0.0
    %881 = vmatprep.subr.mxu0 0.0
    %882 = vmatpush1.msra.mxu0 0.0
    %883 = vmatprep.subr.mxu0 0.0
    %884 = vmatpush1.msra.mxu0 0.0
    %885 = vmatprep.subr.mxu0 0.0
    %886 = vmatpush1.msra.mxu0 0.0
    %887 = vmatprep.subr.mxu0 0.0
    %888 = vmatpush1.msra.mxu0 0.0
    %889 = vmatprep.subr.mxu0 0.0
    %890 = vmatpush1.msra.mxu0 0.0
    %891 = vmatprep.subr.mxu0 0.0
    %892 = vmatpush1.msra.mxu0 0.0
    %893 = vmatprep.subr.mxu0 0.0
    %894 = vmatpush1.msra.mxu0 0.0
    %895 = vmatprep.subr.mxu0 0.0
    %896 = vmatpush1.msra.mxu0 0.0
    %897 = vmatprep.subr.mxu0 0.0
    %898 = vmatpush1.msra.mxu0 0.0
    %899 = vmatprep.subr.mxu0 0.0
    %900 = vmatpush1.msra.mxu0 0.0
    %901 = vmatprep.subr.mxu0 0.0
    %902 = vmatpush1.msra.mxu0 0.0
    %903 = vmatprep.subr.mxu0 0.0
    %904 = vmatpush1.msra.mxu0 0.0
    %905 = vmatprep.subr.mxu0 0.0
    %906 = vmatpush1.msra.mxu0 0.0
    %907 = vmatprep.subr.mxu0 0.0
    %908 = vmatpush1.msra.mxu0 0.0
    %909 = vmatprep.mubr.f32.mxu0 0.0
    %910 = vmatmul.mubr.f32.gmra.mrb[0].mxu0 %v836
    %v911 = vpop.f32.mrb[0].mxu0
    %v912 = vadd.f32 %v342, %v911
    %v913 = vpop.f32.mrb[0].mxu0
    %v914 = vadd.f32 %v346, %v913
    %915 = vmatprep.mubr.f32.mxu0 0.0
    %916 = vmatmul.mubr.f32.gmra.mrb[0].mxu0 %v837
    %v917 = vpop.f32.mrb[0].mxu0
    %v918 = vadd.f32 %v342, %v917
    %v919 = vpop.f32.mrb[0].mxu0
    %v920 = vadd.f32 %v346, %v919
    %921 = vdwg.mxu0
    %v922 = vadd.f32 %v841, %v912
    %v923 = vadd.f32 %v843, %v918
    %v924 = vxor.u32 %v922, 2147483648
    %v925 = vxor.u32 %v923, 2147483648
    %v926 = vmul.f32 %v924, 1.442695
    %v927 = vpow.pop %v926
    %v928 = vmul.f32 %v925, 1.442695
    %v929 = vpow.pop %v928
    %v930 = vadd.f32 %v927, 1.0
    %v931 = vadd.f32 %v929, 1.0
    %v932 = vrcp.pop %v930
    %v933 = vmul.f32 1.0, %v932
    %v934 = vrcp.pop %v931
    %v935 = vmul.f32 1.0, %v934
    %v936 = vmul.f32 %v933, %v914
    %v937 = vmul.f32 %v935, %v920
    %v938 = vadd.f32 %v842, %v936
    %v939 = vadd.f32 %v844, %v937
    %v940 = vtanh.pop %v938
    %v941 = vtanh.pop %v939
    %s942 = scalar_lea.vmem %s1, 64
    %v943 = vld [vmem:[%s942] sm:$0xff]
    %v944 = vld [vmem:[%s942 + $0x8] sm:$0xff]
    %v945 = vsub.f32 %v940, %v836
    %v946 = vsub.f32 %v941, %v837
    %948 = vset.pattern.permute.xlu0 0
    %949 = vperm.xlu0 %948, %v943
    %v950 = vpop.permute.xlu0 %949
    %953 = vset.pattern.permute.xlu0 0
    %954 = vperm.xlu0 %953, %v944
    %v955 = vpop.permute.xlu0 %954
    %v957 = vmul.f32 %v950, %v945
    %v958 = vmul.f32 %v955, %v946
    %v959 = vadd.f32 %v836, %v957
    %v960 = vadd.f32 %v837, %v958
    %s961 = smul.u32 10, 2
    %s962 = smul.addr %s961, 8
    %s963 = scalar_lea.vmem [#allocation2], %s962
    %v964 = vld [vmem:[%s963] sm:$0xff]
    %v965 = vld [vmem:[%s963 + $0x8] sm:$0xff]
    %v966 = vld [vmem:[%s963 + $0x10] sm:$0xff]
    %v967 = vld [vmem:[%s963 + $0x18] sm:$0xff]
    %968 = vmatprep.subr.mxu0 %v306
    %969 = vmatpush1.msra.mxu0 %v305
    %970 = vmatprep.subr.mxu0 %v308
    %971 = vmatpush1.msra.mxu0 %v307
    %972 = vmatprep.subr.mxu0 %v310
    %973 = vmatpush1.msra.mxu0 %v309
    %974 = vmatprep.subr.mxu0 %v312
    %975 = vmatpush1.msra.mxu0 %v311
    %976 = vmatprep.subr.mxu0 %v314
    %977 = vmatpush1.msra.mxu0 %v313
    %978 = vmatprep.subr.mxu0 %v316
    %979 = vmatpush1.msra.mxu0 %v315
    %980 = vmatprep.subr.mxu0 %v318
    %981 = vmatpush1.msra.mxu0 %v317
    %982 = vmatprep.subr.mxu0 %v320
    %983 = vmatpush1.msra.mxu0 %v319
    %984 = vmatprep.subr.mxu0 %v322
    %985 = vmatpush1.msra.mxu0 %v321
    %986 = vmatprep.subr.mxu0 %v324
    %987 = vmatpush1.msra.mxu0 %v323
    %988 = vmatprep.subr.mxu0 %v326
    %989 = vmatpush1.msra.mxu0 %v325
    %990 = vmatprep.subr.mxu0 %v328
    %991 = vmatpush1.msra.mxu0 %v327
    %992 = vmatprep.subr.mxu0 %v330
    %993 = vmatpush1.msra.mxu0 %v329
    %994 = vmatprep.subr.mxu0 %v332
    %995 = vmatpush1.msra.mxu0 %v331
    %996 = vmatprep.subr.mxu0 %v334
    %997 = vmatpush1.msra.mxu0 %v333
    %998 = vmatprep.subr.mxu0 %v336
    %999 = vmatpush1.msra.mxu0 %v335
    %1000 = vmatprep.subr.mxu0 0.0
    %1001 = vmatpush1.msra.mxu0 0.0
    %1002 = vmatprep.subr.mxu0 0.0
    %1003 = vmatpush1.msra.mxu0 0.0
    %1004 = vmatprep.subr.mxu0 0.0
    %1005 = vmatpush1.msra.mxu0 0.0
    %1006 = vmatprep.subr.mxu0 0.0
    %1007 = vmatpush1.msra.mxu0 0.0
    %1008 = vmatprep.subr.mxu0 0.0
    %1009 = vmatpush1.msra.mxu0 0.0
    %1010 = vmatprep.subr.mxu0 0.0
    %1011 = vmatpush1.msra.mxu0 0.0
    %1012 = vmatprep.subr.mxu0 0.0
    %1013 = vmatpush1.msra.mxu0 0.0
    %1014 = vmatprep.subr.mxu0 0.0
    %1015 = vmatpush1.msra.mxu0 0.0
    %1016 = vmatprep.subr.mxu0 0.0
    %1017 = vmatpush1.msra.mxu0 0.0
    %1018 = vmatprep.subr.mxu0 0.0
    %1019 = vmatpush1.msra.mxu0 0.0
    %1020 = vmatprep.subr.mxu0 0.0
    %1021 = vmatpush1.msra.mxu0 0.0
    %1022 = vmatprep.subr.mxu0 0.0
    %1023 = vmatpush1.msra.mxu0 0.0
    %1024 = vmatprep.subr.mxu0 0.0
    %1025 = vmatpush1.msra.mxu0 0.0
    %1026 = vmatprep.subr.mxu0 0.0
    %1027 = vmatpush1.msra.mxu0 0.0
    %1028 = vmatprep.subr.mxu0 0.0
    %1029 = vmatpush1.msra.mxu0 0.0
    %1030 = vmatprep.subr.mxu0 0.0
    %1031 = vmatpush1.msra.mxu0 0.0
    %1032 = vmatprep.mubr.f32.mxu0 0.0
    %1033 = vmatmul.mubr.f32.gmra.mrb[0].mxu0 %v959
    %v1034 = vpop.f32.mrb[0].mxu0
    %v1035 = vadd.f32 %v342, %v1034
    %v1036 = vpop.f32.mrb[0].mxu0
    %v1037 = vadd.f32 %v346, %v1036
    %1038 = vmatprep.mubr.f32.mxu0 0.0
    %1039 = vmatmul.mubr.f32.gmra.mrb[0].mxu0 %v960
    %v1040 = vpop.f32.mrb[0].mxu0
    %v1041 = vadd.f32 %v342, %v1040
    %v1042 = vpop.f32.mrb[0].mxu0
    %v1043 = vadd.f32 %v346, %v1042
    %1044 = vdwg.mxu0
    %v1045 = vadd.f32 %v964, %v1035
    %v1046 = vadd.f32 %v966, %v1041
    %v1047 = vxor.u32 %v1045, 2147483648
    %v1048 = vxor.u32 %v1046, 2147483648
    %v1049 = vmul.f32 %v1047, 1.442695
    %v1050 = vpow.pop %v1049
    %v1051 = vmul.f32 %v1048, 1.442695
    %v1052 = vpow.pop %v1051
    %v1053 = vadd.f32 %v1050, 1.0
    %v1054 = vadd.f32 %v1052, 1.0
    %v1055 = vrcp.pop %v1053
    %v1056 = vmul.f32 1.0, %v1055
    %v1057 = vrcp.pop %v1054
    %v1058 = vmul.f32 1.0, %v1057
    %v1059 = vmul.f32 %v1056, %v1037
    %v1060 = vmul.f32 %v1058, %v1043
    %v1061 = vadd.f32 %v965, %v1059
    %v1062 = vadd.f32 %v967, %v1060
    %v1063 = vtanh.pop %v1061
    %v1064 = vtanh.pop %v1062
    %s1065 = scalar_lea.vmem %s1, 80
    %v1066 = vld [vmem:[%s1065] sm:$0xff]
    %v1067 = vld [vmem:[%s1065 + $0x8] sm:$0xff]
    %v1068 = vsub.f32 %v1063, %v959
    %v1069 = vsub.f32 %v1064, %v960
    %1071 = vset.pattern.permute.xlu0 0
    %1072 = vperm.xlu0 %1071, %v1066
    %v1073 = vpop.permute.xlu0 %1072
    %1076 = vset.pattern.permute.xlu0 0
    %1077 = vperm.xlu0 %1076, %v1067
    %v1078 = vpop.permute.xlu0 %1077
    %v1080 = vmul.f32 %v1073, %v1068
    %v1081 = vmul.f32 %v1078, %v1069
    %v1082 = vadd.f32 %v959, %v1080
    %v1083 = vadd.f32 %v960, %v1081
    %s1084 = smul.u32 12, 2
    %s1085 = smul.addr %s1084, 8
    %s1086 = scalar_lea.vmem [#allocation2], %s1085
    %v1087 = vld [vmem:[%s1086] sm:$0xff]
    %v1088 = vld [vmem:[%s1086 + $0x8] sm:$0xff]
    %v1089 = vld [vmem:[%s1086 + $0x10] sm:$0xff]
    %v1090 = vld [vmem:[%s1086 + $0x18] sm:$0xff]
    %1091 = vmatprep.subr.mxu0 %v306
    %1092 = vmatpush1.msra.mxu0 %v305
    %1093 = vmatprep.subr.mxu0 %v308
    %1094 = vmatpush1.msra.mxu0 %v307
    %1095 = vmatprep.subr.mxu0 %v310
    %1096 = vmatpush1.msra.mxu0 %v309
    %1097 = vmatprep.subr.mxu0 %v312
    %1098 = vmatpush1.msra.mxu0 %v311
    %1099 = vmatprep.subr.mxu0 %v314
    %1100 = vmatpush1.msra.mxu0 %v313
    %1101 = vmatprep.subr.mxu0 %v316
    %1102 = vmatpush1.msra.mxu0 %v315
    %1103 = vmatprep.subr.mxu0 %v318
    %1104 = vmatpush1.msra.mxu0 %v317
    %1105 = vmatprep.subr.mxu0 %v320
    %1106 = vmatpush1.msra.mxu0 %v319
    %1107 = vmatprep.subr.mxu0 %v322
    %1108 = vmatpush1.msra.mxu0 %v321
    %1109 = vmatprep.subr.mxu0 %v324
    %1110 = vmatpush1.msra.mxu0 %v323
    %1111 = vmatprep.subr.mxu0 %v326
    %1112 = vmatpush1.msra.mxu0 %v325
    %1113 = vmatprep.subr.mxu0 %v328
    %1114 = vmatpush1.msra.mxu0 %v327
    %1115 = vmatprep.subr.mxu0 %v330
    %1116 = vmatpush1.msra.mxu0 %v329
    %1117 = vmatprep.subr.mxu0 %v332
    %1118 = vmatpush1.msra.mxu0 %v331
    %1119 = vmatprep.subr.mxu0 %v334
    %1120 = vmatpush1.msra.mxu0 %v333
    %1121 = vmatprep.subr.mxu0 %v336
    %1122 = vmatpush1.msra.mxu0 %v335
    %1123 = vmatprep.subr.mxu0 0.0
    %1124 = vmatpush1.msra.mxu0 0.0
    %1125 = vmatprep.subr.mxu0 0.0
    %1126 = vmatpush1.msra.mxu0 0.0
    %1127 = vmatprep.subr.mxu0 0.0
    %1128 = vmatpush1.msra.mxu0 0.0
    %1129 = vmatprep.subr.mxu0 0.0
    %1130 = vmatpush1.msra.mxu0 0.0
    %1131 = vmatprep.subr.mxu0 0.0
    %1132 = vmatpush1.msra.mxu0 0.0
    %1133 = vmatprep.subr.mxu0 0.0
    %1134 = vmatpush1.msra.mxu0 0.0
    %1135 = vmatprep.subr.mxu0 0.0
    %1136 = vmatpush1.msra.mxu0 0.0
    %1137 = vmatprep.subr.mxu0 0.0
    %1138 = vmatpush1.msra.mxu0 0.0
    %1139 = vmatprep.subr.mxu0 0.0
    %1140 = vmatpush1.msra.mxu0 0.0
    %1141 = vmatprep.subr.mxu0 0.0
    %1142 = vmatpush1.msra.mxu0 0.0
    %1143 = vmatprep.subr.mxu0 0.0
    %1144 = vmatpush1.msra.mxu0 0.0
    %1145 = vmatprep.subr.mxu0 0.0
    %1146 = vmatpush1.msra.mxu0 0.0
    %1147 = vmatprep.subr.mxu0 0.0
    %1148 = vmatpush1.msra.mxu0 0.0
    %1149 = vmatprep.subr.mxu0 0.0
    %1150 = vmatpush1.msra.mxu0 0.0
    %1151 = vmatprep.subr.mxu0 0.0
    %1152 = vmatpush1.msra.mxu0 0.0
    %1153 = vmatprep.subr.mxu0 0.0
    %1154 = vmatpush1.msra.mxu0 0.0
    %1155 = vmatprep.mubr.f32.mxu0 0.0
    %1156 = vmatmul.mubr.f32.gmra.mrb[0].mxu0 %v1082
    %v1157 = vpop.f32.mrb[0].mxu0
    %v1158 = vadd.f32 %v342, %v1157
    %v1159 = vpop.f32.mrb[0].mxu0
    %v1160 = vadd.f32 %v346, %v1159
    %1161 = vmatprep.mubr.f32.mxu0 0.0
    %1162 = vmatmul.mubr.f32.gmra.mrb[0].mxu0 %v1083
    %v1163 = vpop.f32.mrb[0].mxu0
    %v1164 = vadd.f32 %v342, %v1163
    %v1165 = vpop.f32.mrb[0].mxu0
    %v1166 = vadd.f32 %v346, %v1165
    %1167 = vdwg.mxu0
    %v1168 = vadd.f32 %v1087, %v1158
    %v1169 = vadd.f32 %v1089, %v1164
    %v1170 = vxor.u32 %v1168, 2147483648
    %v1171 = vxor.u32 %v1169, 2147483648
    %v1172 = vmul.f32 %v1170, 1.442695
    %v1173 = vpow.pop %v1172
    %v1174 = vmul.f32 %v1171, 1.442695
    %v1175 = vpow.pop %v1174
    %v1176 = vadd.f32 %v1173, 1.0
    %v1177 = vadd.f32 %v1175, 1.0
    %v1178 = vrcp.pop %v1176
    %v1179 = vmul.f32 1.0, %v1178
    %v1180 = vrcp.pop %v1177
    %v1181 = vmul.f32 1.0, %v1180
    %v1182 = vmul.f32 %v1179, %v1160
    %v1183 = vmul.f32 %v1181, %v1166
    %v1184 = vadd.f32 %v1088, %v1182
    %v1185 = vadd.f32 %v1090, %v1183
    %v1186 = vtanh.pop %v1184
    %v1187 = vtanh.pop %v1185
    %s1188 = scalar_lea.vmem %s1, 96
    %v1189 = vld [vmem:[%s1188] sm:$0xff]
    %v1190 = vld [vmem:[%s1188 + $0x8] sm:$0xff]
    %v1191 = vsub.f32 %v1186, %v1082
    %v1192 = vsub.f32 %v1187, %v1083
    %1194 = vset.pattern.permute.xlu0 0
    %1195 = vperm.xlu0 %1194, %v1189
    %v1196 = vpop.permute.xlu0 %1195
    %1199 = vset.pattern.permute.xlu0 0
    %1200 = vperm.xlu0 %1199, %v1190
    %v1201 = vpop.permute.xlu0 %1200
    %v1203 = vmul.f32 %v1196, %v1191
    %v1204 = vmul.f32 %v1201, %v1192
    %v1205 = vadd.f32 %v1082, %v1203
    %v1206 = vadd.f32 %v1083, %v1204
    %s1207 = smul.u32 14, 2
    %s1208 = smul.addr %s1207, 8
    %s1209 = scalar_lea.vmem [#allocation2], %s1208
    %v1210 = vld [vmem:[%s1209] sm:$0xff]
    %v1211 = vld [vmem:[%s1209 + $0x8] sm:$0xff]
    %v1212 = vld [vmem:[%s1209 + $0x10] sm:$0xff]
    %v1213 = vld [vmem:[%s1209 + $0x18] sm:$0xff]
    %1214 = vmatprep.subr.mxu0 %v306
    %1215 = vmatpush1.msra.mxu0 %v305
    %1216 = vmatprep.subr.mxu0 %v308
    %1217 = vmatpush1.msra.mxu0 %v307
    %1218 = vmatprep.subr.mxu0 %v310
    %1219 = vmatpush1.msra.mxu0 %v309
    %1220 = vmatprep.subr.mxu0 %v312
    %1221 = vmatpush1.msra.mxu0 %v311
    %1222 = vmatprep.subr.mxu0 %v314
    %1223 = vmatpush1.msra.mxu0 %v313
    %1224 = vmatprep.subr.mxu0 %v316
    %1225 = vmatpush1.msra.mxu0 %v315
    %1226 = vmatprep.subr.mxu0 %v318
    %1227 = vmatpush1.msra.mxu0 %v317
    %1228 = vmatprep.subr.mxu0 %v320
    %1229 = vmatpush1.msra.mxu0 %v319
    %1230 = vmatprep.subr.mxu0 %v322
    %1231 = vmatpush1.msra.mxu0 %v321
    %1232 = vmatprep.subr.mxu0 %v324
    %1233 = vmatpush1.msra.mxu0 %v323
    %1234 = vmatprep.subr.mxu0 %v326
    %1235 = vmatpush1.msra.mxu0 %v325
    %1236 = vmatprep.subr.mxu0 %v328
    %1237 = vmatpush1.msra.mxu0 %v327
    %1238 = vmatprep.subr.mxu0 %v330
    %1239 = vmatpush1.msra.mxu0 %v329
    %1240 = vmatprep.subr.mxu0 %v332
    %1241 = vmatpush1.msra.mxu0 %v331
    %1242 = vmatprep.subr.mxu0 %v334
    %1243 = vmatpush1.msra.mxu0 %v333
    %1244 = vmatprep.subr.mxu0 %v336
    %1245 = vmatpush1.msra.mxu0 %v335
    %1246 = vmatprep.subr.mxu0 0.0
    %1247 = vmatpush1.msra.mxu0 0.0
    %1248 = vmatprep.subr.mxu0 0.0
    %1249 = vmatpush1.msra.mxu0 0.0
    %1250 = vmatprep.subr.mxu0 0.0
    %1251 = vmatpush1.msra.mxu0 0.0
    %1252 = vmatprep.subr.mxu0 0.0
    %1253 = vmatpush1.msra.mxu0 0.0
    %1254 = vmatprep.subr.mxu0 0.0
    %1255 = vmatpush1.msra.mxu0 0.0
    %1256 = vmatprep.subr.mxu0 0.0
    %1257 = vmatpush1.msra.mxu0 0.0
    %1258 = vmatprep.subr.mxu0 0.0
    %1259 = vmatpush1.msra.mxu0 0.0
    %1260 = vmatprep.subr.mxu0 0.0
    %1261 = vmatpush1.msra.mxu0 0.0
    %1262 = vmatprep.subr.mxu0 0.0
    %1263 = vmatpush1.msra.mxu0 0.0
    %1264 = vmatprep.subr.mxu0 0.0
    %1265 = vmatpush1.msra.mxu0 0.0
    %1266 = vmatprep.subr.mxu0 0.0
    %1267 = vmatpush1.msra.mxu0 0.0
    %1268 = vmatprep.subr.mxu0 0.0
    %1269 = vmatpush1.msra.mxu0 0.0
    %1270 = vmatprep.subr.mxu0 0.0
    %1271 = vmatpush1.msra.mxu0 0.0
    %1272 = vmatprep.subr.mxu0 0.0
    %1273 = vmatpush1.msra.mxu0 0.0
    %1274 = vmatprep.subr.mxu0 0.0
    %1275 = vmatpush1.msra.mxu0 0.0
    %1276 = vmatprep.subr.mxu0 0.0
    %1277 = vmatpush1.msra.mxu0 0.0
    %1278 = vmatprep.mubr.f32.mxu0 0.0
    %1279 = vmatmul.mubr.f32.gmra.mrb[0].mxu0 %v1205
    %v1280 = vpop.f32.mrb[0].mxu0
    %v1281 = vadd.f32 %v342, %v1280
    %v1282 = vpop.f32.mrb[0].mxu0
    %v1283 = vadd.f32 %v346, %v1282
    %1284 = vmatprep.mubr.f32.mxu0 0.0
    %1285 = vmatmul.mubr.f32.gmra.mrb[0].mxu0 %v1206
    %v1286 = vpop.f32.mrb[0].mxu0
    %v1287 = vadd.f32 %v342, %v1286
    %v1288 = vpop.f32.mrb[0].mxu0
    %v1289 = vadd.f32 %v346, %v1288
    %1290 = vdwg.mxu0
    %v1291 = vadd.f32 %v1210, %v1281
    %v1292 = vadd.f32 %v1212, %v1287
    %v1293 = vxor.u32 %v1291, 2147483648
    %v1294 = vxor.u32 %v1292, 2147483648
    %v1295 = vmul.f32 %v1293, 1.442695
    %v1296 = vpow.pop %v1295
    %v1297 = vmul.f32 %v1294, 1.442695
    %v1298 = vpow.pop %v1297
    %v1299 = vadd.f32 %v1296, 1.0
    %v1300 = vadd.f32 %v1298, 1.0
    %v1301 = vrcp.pop %v1299
    %v1302 = vmul.f32 1.0, %v1301
    %v1303 = vrcp.pop %v1300
    %v1304 = vmul.f32 1.0, %v1303
    %v1305 = vmul.f32 %v1302, %v1283
    %v1306 = vmul.f32 %v1304, %v1289
    %v1307 = vadd.f32 %v1211, %v1305
    %v1308 = vadd.f32 %v1213, %v1306
    %v1309 = vtanh.pop %v1307
    %v1310 = vtanh.pop %v1308
    %s1311 = scalar_lea.vmem %s1, 112
    %v1312 = vld [vmem:[%s1311] sm:$0xff]
    %v1313 = vld [vmem:[%s1311 + $0x8] sm:$0xff]
    %v1314 = vsub.f32 %v1309, %v1205
    %v1315 = vsub.f32 %v1310, %v1206
    %1317 = vset.pattern.permute.xlu0 0
    %1318 = vperm.xlu0 %1317, %v1312
    %v1319 = vpop.permute.xlu0 %1318
    %1322 = vset.pattern.permute.xlu0 0
    %1323 = vperm.xlu0 %1322, %v1313
    %v1324 = vpop.permute.xlu0 %1323
    %v1326 = vmul.f32 %v1319, %v1314
    %v1327 = vmul.f32 %v1324, %v1315
    %v1328 = vadd.f32 %v1205, %v1326
    %v1329 = vadd.f32 %v1206, %v1327
    %1330 = vst [vmem:[#allocation8] sm:$0xff] %v1328
    %1331 = vst [vmem:[#allocation8 + $0x8] sm:$0xff] %v1329
    // Predicated region
    $region34: #{tpu_custom_call.1} parent=1 // pred_check
      _
    $region35: #{tpu_custom_call.1} parent=1 // pred_check_branch
      %1333 = sbr.rel (0) target = $region37
    $region36: #{tpu_custom_call.1} parent=1 // pred_region
      %s1335 = ssub.s32 256, 256
      %1336 = vsyncadd [#allocation5], %s1335
      %s1337 = sshll.u32 [#allocation8], 4
      %s1338 = int_to_ptr.vmem [resolvable:$true] %s1337
      %1343 = dma.vmem_to_hbm [thread:$0]  %s1338, 256, %s6, [#allocation5], 128, 128, 8
    $region37: #{tpu_custom_call.1} parent=1 // pred_fallthru
      _
    // Predicated region
    $region38: #{tpu_custom_call.1} parent=1 // pred_check
      _
    $region39: #{tpu_custom_call.1} parent=1 // pred_check_branch
      %1345 = sbr.rel (0) target = $region41
    $region40: #{tpu_custom_call.1} parent=1 // pred_region
      %1346 = dma.done [#allocation5], 256
    $region41: #{tpu_custom_call.1} parent=1 // pred_fallthru
      _
    %1347 = vsyncpa [#allocation4], 1
    %1348 = vsyncpa [#allocation7], 1
    %1349 = vsyncpa [#allocation5], 1

</llo_original>
